<compile_context>
chip_gen: v5e
topology: v5e:2x2
jax: 0.10.0
libtpu: 0.0.40
codegen_flags: <defaults>
</compile_context>

<pallas_src>
import functools

import jax
import jax.numpy as jnp
from jax import lax
from jax.experimental import pallas as pl
from jax.experimental.pallas import tpu as pltpu


_LANE = 128
_MAX_TILE_BYTES = 8 * 1024 * 1024   # per-input, per-pipeline-buffer ceiling
_MIN_TILE_BYTES = 2 * 1024 * 1024
_N_SPLIT = 2                        # K-reduction split (one half per TC on v7x)


def _round_up(x, m):
    return ((x + m - 1) // m) * m


def _vmem_capacity_bytes():
    """Physical VMEM of the current TPU generation (conservative fallback)."""
    try:
        return int(pltpu.get_tpu_info().vmem_capacity_bytes)
    except Exception:
        return 64 << 20   # v7x per-TensorCore VMEM; safe lower bound


def _cap_tile(d, b, itemsize, tile_bytes, max_tile):
    """Largest lane-aligned feature tile within the per-buffer byte budget."""
    max_elems = max(_LANE, tile_bytes // max(1, b * itemsize))
    if max_tile is not None:
        max_elems = min(max_elems, max(_LANE, max_tile))
    if d <= max_elems:
        return d                                      # full extent: always legal
    return max(_LANE, (max_elems // _LANE) * _LANE)   # multiple of 128


def _balanced_tile(d, n_steps):
    """Tile so `d` is covered in ~n_steps lane-aligned tiles (keeps both
    inputs' DMA streams active for the whole grid)."""
    if n_steps <= 1:
        return d
    t = _round_up(pl.cdiv(d, n_steps), _LANE)
    return d if t >= d else t


def _sp_gram_kernel(fv_ref, ft_ref, gv_out, gt_out, gv_acc, gt_acc, *,
                    dv, dt, tkv, tkt, nkv, nkt, hkv, hkt, prec_v, prec_t):
    c = pl.program_id(0)    # K-split index (maps to a TensorCore on v7x)
    k = pl.program_id(1)    # reduction step within this split
    nk = pl.num_programs(1)

    @pl.when(k == 0)
    def _init():
        gv_acc[...] = jnp.zeros_like(gv_acc)
        gt_acc[...] = jnp.zeros_like(gt_acc)

    def _accumulate(ref, acc, tk, d_total, n_tiles, half, prec):
        g = c * half + k    # global tile index of this input for this step

        def _dot(x):
            # Gram partial: contract last dims of (x, x) -> X @ X.T, f32 acc.
            acc[...] += lax.dot_general(
                x, x,
                dimension_numbers=(((1,), (1,)), ((), ())),
                preferred_element_type=jnp.float32,
                precision=prec)

        if d_total % tk == 0:
            @pl.when(jnp.logical_and(k < half, g < n_tiles))
            def _full():
                _dot(ref[...])
        else:
            # Hot path: full tiles, no masking work.
            @pl.when(jnp.logical_and(k < half, g < n_tiles - 1))
            def _full():
                _dot(ref[...])

            # Cold path: single ragged final tile, mask OOB feature columns.
            @pl.when(jnp.logical_and(k < half, g == n_tiles - 1))
            def _tail():
                x = ref[...]
                col = (lax.broadcasted_iota(jnp.int32, x.shape, 1)
                       + (n_tiles - 1) * tk)
                _dot(jnp.where(col < d_total, x, jnp.zeros_like(x)))

    _accumulate(fv_ref, gv_acc, tkv, dv, nkv, hkv, prec_v)
    _accumulate(ft_ref, gt_acc, tkt, dt, nkt, hkt, prec_t)

    @pl.when(k == nk - 1)
    def _finalize():
        gv_out[0, :, :] = gv_acc[...]
        gt_out[0, :, :] = gt_acc[...]


def sp_loss(feat_v, feat_t, *, max_tile=None):
    """feat_v, feat_t: NCHW (or any shape with matching leading batch dim).

    Returns the scalar SP loss (float32).
    """
    b = feat_v.shape[0]
    assert feat_t.shape[0] == b, "batch dims must match"
    fv = feat_v.reshape(b, -1)
    ft = feat_t.reshape(b, -1)
    dv, dt = fv.shape[1], ft.shape[1]

    # --- per-generation tile sizing -------------------------------------
    vmem_cap = _vmem_capacity_bytes()
    # 2 inputs x 2 pipeline buffers kept around <= 1/3 of physical VMEM.
    tile_bytes = int(min(_MAX_TILE_BYTES, max(_MIN_TILE_BYTES, vmem_cap // 12)))

    tkv0 = _cap_tile(dv, b, fv.dtype.itemsize, tile_bytes, max_tile)
    tkt0 = _cap_tile(dt, b, ft.dtype.itemsize, tile_bytes, max_tile)
    n_steps = max(pl.cdiv(dv, tkv0), pl.cdiv(dt, tkt0))

    # Balance both inputs so they finish on (almost) the same grid step.
    tkv = _balanced_tile(dv, n_steps)
    tkt = _balanced_tile(dt, n_steps)
    nkv = pl.cdiv(dv, tkv)
    nkt = pl.cdiv(dt, tkt)

    # Split the K reduction across TensorCores only when there is enough work
    # (avoids re-streaming tiny inputs on single-TC chips).
    n_split = _N_SPLIT if max(nkv, nkt) >= _N_SPLIT else 1
    hkv = pl.cdiv(nkv, n_split)
    hkt = pl.cdiv(nkt, n_split)
    nk = max(hkv, hkt)

    # f32 inputs: full-precision MXU passes for parity with the f32 reference
    # (hidden under DMA on v5e/v6e). bf16 inputs go to the MXU natively.
    prec_v = lax.Precision.HIGHEST if fv.dtype == jnp.float32 else None
    prec_t = lax.Precision.HIGHEST if ft.dtype == jnp.float32 else None

    kernel = functools.partial(
        _sp_gram_kernel, dv=dv, dt=dt, tkv=tkv, tkt=tkt, nkv=nkv, nkt=nkt,
        hkv=hkv, hkt=hkt, prec_v=prec_v, prec_t=prec_t)

    vmem_limit = int(min(vmem_cap, max(32 << 20, 4 * tile_bytes + (8 << 20))))

    cost = pl.CostEstimate(
        flops=2 * b * b * (dv + dt),
        transcendentals=0,
        bytes_accessed=(fv.size * fv.dtype.itemsize
                        + ft.size * ft.dtype.itemsize
                        + 2 * n_split * b * b * 4),
    )

    gv_parts, gt_parts = pl.pallas_call(
        kernel,
        out_shape=(jax.ShapeDtypeStruct((n_split, b, b), jnp.float32),
                   jax.ShapeDtypeStruct((n_split, b, b), jnp.float32)),
        grid=(n_split, nk),
        in_specs=[
            # Clamp the block index so each input keeps (re)viewing its last
            # valid tile once its own reduction range is exhausted; the
            # accumulation is gated off by pl.when, and an unchanged block
            # index issues no new DMA.
            pl.BlockSpec((b, tkv),
                         lambda c, k: (0, jnp.minimum(c * hkv + k, nkv - 1))),
            pl.BlockSpec((b, tkt),
                         lambda c, k: (0, jnp.minimum(c * hkt + k, nkt - 1))),
        ],
        out_specs=(
            pl.BlockSpec((1, b, b), lambda c, k: (c, 0, 0)),
            pl.BlockSpec((1, b, b), lambda c, k: (c, 0, 0)),
        ),
        scratch_shapes=[
            pltpu.VMEM((b, b), jnp.float32),   # G_v partial accumulator
            pltpu.VMEM((b, b), jnp.float32),   # G_t partial accumulator
        ],
        compiler_params=pltpu.CompilerParams(
            dimension_semantics=("parallel", "arbitrary"),
            vmem_limit_bytes=vmem_limit),
        cost_estimate=cost,
    )(fv, ft)

    # Tiny [B,B] epilogue in plain JAX: combine K-split partials, row-wise
    # L2-normalize (F.normalize semantics, eps=1e-12), MSE.
    gv = jnp.sum(gv_parts, axis=0)
    gt = jnp.sum(gt_parts, axis=0)
    eps = jnp.float32(1e-12)
    inv_v = lax.rsqrt(jnp.maximum(jnp.sum(gv * gv, axis=1, keepdims=True),
                                  eps * eps))
    inv_t = lax.rsqrt(jnp.maximum(jnp.sum(gt * gt, axis=1, keepdims=True),
                                  eps * eps))
    diff = gv * inv_v - gt * inv_t
    return jnp.mean(diff * diff)


def _ref_sp_loss(feat_v, feat_t):
    # pure-JAX reference (matches PyTorch SP.forward, f32 math)
    b = feat_v.shape[0]
    fv = feat_v.reshape(b, -1).astype(jnp.float32)
    ft = feat_t.reshape(b, -1).astype(jnp.float32)
    gv = jnp.dot(fv, fv.T, precision=lax.Precision.HIGHEST)
    gt = jnp.dot(ft, ft.T, precision=lax.Precision.HIGHEST)
    eps = 1e-12
    nv = gv / jnp.maximum(jnp.linalg.norm(gv, axis=1, keepdims=True), eps)
    nt = gt / jnp.maximum(jnp.linalg.norm(gt, axis=1, keepdims=True), eps)
    return jnp.mean((nv - nt) ** 2)


if __name__ == "__main__":
    key = jax.random.PRNGKey(0)
    k_v, k_t = jax.random.split(key)

    # Two NCHW feature maps sharing the batch dim (small shapes).
    feat_v = jax.random.normal(k_v, (8, 4, 16, 16), dtype=jnp.float32)  # -> [8, 1024]
    feat_t = jax.random.normal(k_t, (8, 7, 8, 8), dtype=jnp.float32)    # -> [8, 448]

    ref = jax.block_until_ready(_ref_sp_loss(feat_v, feat_t))

    # 1) auto tiling: at these small shapes each input is a single tile.
    loss_auto = jax.block_until_ready(sp_loss(feat_v, feat_t))
    # 2) forced small tiles: multi-step grid, K split across cores, balanced
    #    tile sizes (256 vs 128) and a masked ragged tail (448 % 128 != 0).
    loss_tiled = jax.block_until_ready(sp_loss(feat_v, feat_t, max_tile=256))

    assert jnp.allclose(loss_auto, ref, rtol=1e-4, atol=1e-6), (loss_auto, ref)
    assert jnp.allclose(loss_tiled, ref, rtol=1e-4, atol=1e-6), (loss_tiled, ref)
    print("KERNEL_OK")
</pallas_src>

<mosaic_0001>
module attributes {stable_mosaic.version = 11 : i64} {
  func.func @_sp_gram_kernel(%arg0: i32, %arg1: i32, %arg2: memref<8x1024xf32, #tpu.memory_space<vmem>>, %arg3: memref<8x448xf32, #tpu.memory_space<vmem>>, %arg4: memref<1x8x8xf32, #tpu.memory_space<vmem>>, %arg5: memref<1x8x8xf32, #tpu.memory_space<vmem>>, %arg6: memref<8x8xf32, #tpu.memory_space<vmem>>, %arg7: memref<8x8xf32, #tpu.memory_space<vmem>>) attributes {dimension_semantics = [#tpu.dimension_semantics<parallel>, #tpu.dimension_semantics<arbitrary>], iteration_bounds = array<i64: 1, 1>, scalar_prefetch = 0 : i64, scratch_operands = 2 : i64, tpu.core_type = #tpu.core_type<tc>, window_params = [{transform_indices = @transform_0, window_bounds = array<i64: 8, 1024>}, {transform_indices = @transform_1, window_bounds = array<i64: 8, 448>}, {transform_indices = @transform_2, window_bounds = array<i64: 1, 8, 8>}, {transform_indices = @transform_3, window_bounds = array<i64: 1, 8, 8>}]} {
    %c0_i32 = arith.constant 0 : i32
    %0 = arith.cmpi eq, %arg1, %c0_i32 : i32
    %1 = arith.extui %0 : i1 to i32
    %c0_i32_0 = arith.constant 0 : i32
    %2 = arith.cmpi ne, %1, %c0_i32_0 : i32
    scf.if %2 {
      %cst = arith.constant 0.000000e+00 : f32
      %20 = vector.broadcast %cst : f32 to vector<8x8xf32>
      %c0 = arith.constant 0 : index
      %c0_10 = arith.constant 0 : index
      %21 = vector.load %arg6[%c0, %c0_10] : memref<8x8xf32, #tpu.memory_space<vmem>>, vector<8x8xf32>
      tpu.vector_store %arg6[%c0, %c0_10], %20 {strides = array<i32>} : memref<8x8xf32, #tpu.memory_space<vmem>>, vector<8x8xf32>,
      %cst_11 = arith.constant 0.000000e+00 : f32
      %22 = vector.broadcast %cst_11 : f32 to vector<8x8xf32>
      %c0_12 = arith.constant 0 : index
      %c0_13 = arith.constant 0 : index
      %23 = vector.load %arg7[%c0_12, %c0_13] : memref<8x8xf32, #tpu.memory_space<vmem>>, vector<8x8xf32>
      tpu.vector_store %arg7[%c0_12, %c0_13], %22 {strides = array<i32>} : memref<8x8xf32, #tpu.memory_space<vmem>>, vector<8x8xf32>,
    } else {
    }
    %c1_i32 = arith.constant 1 : i32
    %3 = arith.muli %arg0, %c1_i32 : i32
    %4 = arith.addi %3, %arg1 : i32
    %c1_i32_1 = arith.constant 1 : i32
    %5 = arith.cmpi slt, %arg1, %c1_i32_1 : i32
    %c1_i32_2 = arith.constant 1 : i32
    %6 = arith.cmpi slt, %4, %c1_i32_2 : i32
    %7 = arith.andi %5, %6 : i1
    %8 = arith.extui %7 : i1 to i32
    %c0_i32_3 = arith.constant 0 : i32
    %9 = arith.cmpi ne, %8, %c0_i32_3 : i32
    scf.if %9 {
      %c0 = arith.constant 0 : index
      %c0_10 = arith.constant 0 : index
      %20 = vector.load %arg2[%c0, %c0_10] : memref<8x1024xf32, #tpu.memory_space<vmem>>, vector<8x1024xf32>
      %c0_11 = arith.constant 0 : index
      %c0_12 = arith.constant 0 : index
      %21 = vector.load %arg6[%c0_11, %c0_12] : memref<8x8xf32, #tpu.memory_space<vmem>>, vector<8x8xf32>
      %cst = arith.constant dense<0.000000e+00> : vector<8x8xf32>
      %22 = tpu.matmul %20, %20, %cst {dimension_numbers = #tpu.dot_dimension_numbers<[1], [1], [0], [0], [0, 0, 1, 0], [], []>, precision = #tpu.contract_precision<fp32>} : vector<8x1024xf32>, vector<8x1024xf32>, vector<8x8xf32> -> vector<8x8xf32>
      %23 = arith.addf %21, %22 : vector<8x8xf32>
      %c0_13 = arith.constant 0 : index
      %c0_14 = arith.constant 0 : index
      %24 = vector.load %arg6[%c0_13, %c0_14] : memref<8x8xf32, #tpu.memory_space<vmem>>, vector<8x8xf32>
      tpu.vector_store %arg6[%c0_13, %c0_14], %23 {strides = array<i32>} : memref<8x8xf32, #tpu.memory_space<vmem>>, vector<8x8xf32>,
    } else {
    }
    %c1_i32_4 = arith.constant 1 : i32
    %10 = arith.muli %arg0, %c1_i32_4 : i32
    %11 = arith.addi %10, %arg1 : i32
    %c1_i32_5 = arith.constant 1 : i32
    %12 = arith.cmpi slt, %arg1, %c1_i32_5 : i32
    %c1_i32_6 = arith.constant 1 : i32
    %13 = arith.cmpi slt, %11, %c1_i32_6 : i32
    %14 = arith.andi %12, %13 : i1
    %15 = arith.extui %14 : i1 to i32
    %c0_i32_7 = arith.constant 0 : i32
    %16 = arith.cmpi ne, %15, %c0_i32_7 : i32
    scf.if %16 {
      %c0 = arith.constant 0 : index
      %c0_10 = arith.constant 0 : index
      %20 = vector.load %arg3[%c0, %c0_10] : memref<8x448xf32, #tpu.memory_space<vmem>>, vector<8x448xf32>
      %c0_11 = arith.constant 0 : index
      %c0_12 = arith.constant 0 : index
      %21 = vector.load %arg7[%c0_11, %c0_12] : memref<8x8xf32, #tpu.memory_space<vmem>>, vector<8x8xf32>
      %cst = arith.constant dense<0.000000e+00> : vector<8x8xf32>
      %22 = tpu.matmul %20, %20, %cst {dimension_numbers = #tpu.dot_dimension_numbers<[1], [1], [0], [0], [0, 0, 1, 0], [], []>, precision = #tpu.contract_precision<fp32>} : vector<8x448xf32>, vector<8x448xf32>, vector<8x8xf32> -> vector<8x8xf32>
      %23 = arith.addf %21, %22 : vector<8x8xf32>
      %c0_13 = arith.constant 0 : index
      %c0_14 = arith.constant 0 : index
      %24 = vector.load %arg7[%c0_13, %c0_14] : memref<8x8xf32, #tpu.memory_space<vmem>>, vector<8x8xf32>
      tpu.vector_store %arg7[%c0_13, %c0_14], %23 {strides = array<i32>} : memref<8x8xf32, #tpu.memory_space<vmem>>, vector<8x8xf32>,
    } else {
    }
    %c0_i32_8 = arith.constant 0 : i32
    %17 = arith.cmpi eq, %arg1, %c0_i32_8 : i32
    %18 = arith.extui %17 : i1 to i32
    %c0_i32_9 = arith.constant 0 : i32
    %19 = arith.cmpi ne, %18, %c0_i32_9 : i32
    scf.if %19 {
      %c0 = arith.constant 0 : index
      %c0_10 = arith.constant 0 : index
      %20 = vector.load %arg6[%c0, %c0_10] : memref<8x8xf32, #tpu.memory_space<vmem>>, vector<8x8xf32>
      %c0_11 = arith.constant 0 : index
      %c0_12 = arith.constant 0 : index
      %c0_13 = arith.constant 0 : index
      %21 = vector.load %arg4[%c0_11, %c0_12, %c0_13] : memref<1x8x8xf32, #tpu.memory_space<vmem>>, vector<1x8x8xf32>
      %22 = vector.shape_cast %21 : vector<1x8x8xf32> to vector<8x8xf32>
      %23 = vector.shape_cast %20 : vector<8x8xf32> to vector<1x8x8xf32>
      tpu.vector_store %arg4[%c0_11, %c0_12, %c0_13], %23 {strides = array<i32>} : memref<1x8x8xf32, #tpu.memory_space<vmem>>, vector<1x8x8xf32>,
      %c0_14 = arith.constant 0 : index
      %c0_15 = arith.constant 0 : index
      %24 = vector.load %arg7[%c0_14, %c0_15] : memref<8x8xf32, #tpu.memory_space<vmem>>, vector<8x8xf32>
      %c0_16 = arith.constant 0 : index
      %c0_17 = arith.constant 0 : index
      %c0_18 = arith.constant 0 : index
      %25 = vector.load %arg5[%c0_16, %c0_17, %c0_18] : memref<1x8x8xf32, #tpu.memory_space<vmem>>, vector<1x8x8xf32>
      %26 = vector.shape_cast %25 : vector<1x8x8xf32> to vector<8x8xf32>
      %27 = vector.shape_cast %24 : vector<8x8xf32> to vector<1x8x8xf32>
      tpu.vector_store %arg5[%c0_16, %c0_17, %c0_18], %27 {strides = array<i32>} : memref<1x8x8xf32, #tpu.memory_space<vmem>>, vector<1x8x8xf32>,
    } else {
    }
    return
  }
  func.func @transform_0(%arg0: i32, %arg1: i32) -> (i32, i32) {
    %c1_i32 = arith.constant 1 : i32
    %0 = arith.muli %arg0, %c1_i32 : i32
    %1 = arith.addi %0, %arg1 : i32
    %c0_i32 = arith.constant 0 : i32
    %2 = arith.minsi %1, %c0_i32 : i32
    %c0_i32_0 = arith.constant 0 : i32
    %c0_i32_1 = arith.constant 0 : i32
    return %c0_i32_0, %2 : i32, i32
  }
  func.func @transform_1(%arg0: i32, %arg1: i32) -> (i32, i32) {
    %c1_i32 = arith.constant 1 : i32
    %0 = arith.muli %arg0, %c1_i32 : i32
    %1 = arith.addi %0, %arg1 : i32
    %c0_i32 = arith.constant 0 : i32
    %2 = arith.minsi %1, %c0_i32 : i32
    %c0_i32_0 = arith.constant 0 : i32
    %c0_i32_1 = arith.constant 0 : i32
    return %c0_i32_0, %2 : i32, i32
  }
  func.func @transform_2(%arg0: i32, %arg1: i32) -> (i32, i32, i32) {
    %c0_i32 = arith.constant 0 : i32
    %c0_i32_0 = arith.constant 0 : i32
    %c0_i32_1 = arith.constant 0 : i32
    return %arg0, %c0_i32, %c0_i32_0 : i32, i32, i32
  }
  func.func @transform_3(%arg0: i32, %arg1: i32) -> (i32, i32, i32) {
    %c0_i32 = arith.constant 0 : i32
    %c0_i32_0 = arith.constant 0 : i32
    %c0_i32_1 = arith.constant 0 : i32
    return %arg0, %c0_i32, %c0_i32_0 : i32, i32, i32
  }
}

</mosaic_0001>

<llo_original>
// kernel: tpu_custom_call.1
$region0: #{tpu_custom_call.1}
  #allocation0 [shape = 'u32[]', space=smem, size = 0x4, offset = 0x4, fixed_abs, tag = 'smem constant byte address 0x4 - core index']
  #allocation1 [shape = 'u32[72,128]{1,0:T(1,128)}', space=vmem, size = 0x9000, scoped, tag = 'internal scratch']
  #allocation2 [shape = 'f32[8,8]{1,0:T(8,128)}', space=vmem, size = 0x1000, scoped, tag = 'scratch operand']
  #allocation3 [shape = 'f32[8,8]{1,0:T(8,128)}', space=vmem, size = 0x1000, scoped, tag = 'scratch operand']
  %s0 = inlined_call_operand.hbm [shape: f32[8,1024], index: 0, kind: input, shape index: {}]
  %s1 = inlined_call_operand.hbm [shape: f32[8,448], index: 1, kind: input, shape index: {}]
  %s2 = inlined_call_operand.hbm [shape: f32[1,8,8], index: 2, kind: output, shape index: {0}]
  %s3 = inlined_call_operand.hbm [shape: f32[1,8,8], index: 3, kind: output, shape index: {1}]
  %4 = xla_tuple %s2, %s3
  %s5 = sld [smem:[#allocation0]]
  $region46: #{tpu_custom_call.1} parent=0
    _
  %s7 = ssub.s32 1, %s5
  %s8 = scalar_select 0, %s7, %s5
  $region1: #{tpu_custom_call.1} parent=0
    #allocation4 [shape = 'u8[32768]{0}', space=vmem, size = 0x8000, scoped, tag = 'input window, operand 0, single buffered']
    #allocation5 [shape = 's32[1]{0}', space=sflag, size = 0x4, scoped, tag = 'scoped memory for tpu_custom_call.1']
    #allocation6 [shape = 's32[1]{0}', space=sflag, size = 0x4, scoped, tag = 'scoped memory for tpu_custom_call.1']
    #allocation7 [shape = 'u8[16384]{0}', space=vmem, size = 0x4000, scoped, tag = 'input window, operand 1, single buffered']
    #allocation8 [shape = 's32[1]{0}', space=sflag, size = 0x4, scoped, tag = 'scoped memory for tpu_custom_call.1']
    #allocation9 [shape = 'u8[4096]{0}', space=vmem, size = 0x1000, scoped, tag = 'output window, operand 0, single buffered']
    #allocation10 [shape = 'u8[4096]{0}', space=vmem, size = 0x1000, scoped, tag = 'output window, operand 1, single buffered']
    #allocation11 [shape = 's32[1]{0}', space=sflag, size = 0x4, scoped, tag = 'scoped memory for tpu_custom_call.1']
    %9 = vsyncpa [#allocation5], 0
    %10 = vsyncpa [#allocation8], 0
    %11 = vsyncpa [#allocation6], 0
    %12 = vsyncpa [#allocation11], 0
    // Predicated region
    $region2: #{tpu_custom_call.1} parent=1 // pred_check
      _
    $region3: #{tpu_custom_call.1} parent=1 // pred_check_branch
      %14 = sbr.rel (0) target = $region5
    $region4: #{tpu_custom_call.1} parent=1 // pred_region
      %s15 = sadd.s32 0, 0
      %p16 = scmp.lt.s32.totalorder %s15, 0
      %s17 = scalar_select %p16, %s15, 0
      %s18 = smul.u32 8, %s17
      %20 = vsyncadd [#allocation5], 0
      %s21 = smul.addr %s18, 8
      %s22 = scalar_lea.hbm %s0, %s21
      %s24 = sshll.u32 %s22, 4
      %s25 = int_to_ptr.hbm [resolvable:$true] %s24
      %s26 = sshll.u32 [#allocation4], 4
      %s27 = int_to_ptr.vmem [resolvable:$true] %s26
      %29 = dma.hbm_to_vmem [thread:$0]  %s25, 1024, %s27, [#allocation5]
    $region5: #{tpu_custom_call.1} parent=1 // pred_fallthru
      _
    // Predicated region
    $region6: #{tpu_custom_call.1} parent=1 // pred_check
      _
    $region7: #{tpu_custom_call.1} parent=1 // pred_check_branch
      %31 = sbr.rel (0) target = $region9
    $region8: #{tpu_custom_call.1} parent=1 // pred_region
      %s32 = sadd.s32 0, 0
      %p33 = scmp.lt.s32.totalorder %s32, 0
      %s34 = scalar_select %p33, %s32, 0
      %s35 = smul.u32 4, %s34
      %37 = vsyncadd [#allocation8], 0
      %s38 = smul.addr %s35, 8
      %s39 = scalar_lea.hbm %s1, %s38
      %s41 = sshll.u32 %s39, 4
      %s42 = int_to_ptr.hbm [resolvable:$true] %s41
      %s43 = sshll.u32 [#allocation7], 4
      %s44 = int_to_ptr.vmem [resolvable:$true] %s43
      %46 = dma.hbm_to_vmem [thread:$0]  %s42, 512, %s44, [#allocation8]
    $region9: #{tpu_custom_call.1} parent=1 // pred_fallthru
      _
    // Predicated region
    $region10: #{tpu_custom_call.1} parent=1 // pred_check
      _
    $region11: #{tpu_custom_call.1} parent=1 // pred_check_branch
      %48 = sbr.rel (0) target = $region13
    $region12: #{tpu_custom_call.1} parent=1 // pred_region
      %50 = dma.done [#allocation5], 1024
    $region13: #{tpu_custom_call.1} parent=1 // pred_fallthru
      _
    // Predicated region
    $region14: #{tpu_custom_call.1} parent=1 // pred_check
      _
    $region15: #{tpu_custom_call.1} parent=1 // pred_check_branch
      %52 = sbr.rel (0) target = $region17
    $region16: #{tpu_custom_call.1} parent=1 // pred_region
      %54 = dma.done [#allocation8], 512
    $region17: #{tpu_custom_call.1} parent=1 // pred_fallthru
      _
    %s55 = sadd.s32 0, 0
    %p56 = scmp.lt.s32.totalorder %s55, 0
    %s57 = scalar_select %p56, %s55, 0
    %s58 = smul.u32 8, %s57
    %s59 = sadd.s32 0, 0
    %p60 = scmp.lt.s32.totalorder %s59, 0
    %s61 = scalar_select %p60, %s59, 0
    %s62 = smul.u32 4, %s61
    %p63 = scmp.eq.s32.totalorder 0, 0
    // Predicated region
    $region18: #{tpu_custom_call.1} parent=1 // pred_check
      %p64 = pneg %p63
    $region19: #{tpu_custom_call.1} parent=1 // pred_check_branch
      %66 = sbr.rel (%p64) target = $region21
    $region20: #{tpu_custom_call.1} parent=1 // pred_region
      %vm67 = vcmask 64512
      %68 = vst.msk [vmem:[#allocation2] sm:$0xff] %vm67, 0.0
      %69 = vst.msk [vmem:[#allocation3] sm:$0xff] %vm67, 0.0
    $region21: #{tpu_custom_call.1} parent=1 // pred_fallthru
      _
    %s70 = sadd.s32 0, 0
    %p71 = scmp.lt.s32.totalorder 0, 1
    %p72 = scmp.lt.s32.totalorder %s70, 1
    %p73 = pnand %p71, %p72
    %p74 = pneg %p73
    // Predicated region
    $region22: #{tpu_custom_call.1} parent=1 // pred_check
      _
    $region23: #{tpu_custom_call.1} parent=1 // pred_check_branch
      %76 = sbr.rel (%p73) target = $region25
    $region24: #{tpu_custom_call.1} parent=1 // pred_region
      %v77 = vld [vmem:[#allocation4] sm:$0xff]
      %v78 = vld [vmem:[#allocation4 + $0x8] sm:$0xff]
      %v79 = vld [vmem:[#allocation4 + $0x10] sm:$0xff]
      %v80 = vld [vmem:[#allocation4 + $0x18] sm:$0xff]
      %v81 = vld [vmem:[#allocation4 + $0x20] sm:$0xff]
      %v82 = vld [vmem:[#allocation4 + $0x28] sm:$0xff]
      %v83 = vld [vmem:[#allocation4 + $0x30] sm:$0xff]
      %v84 = vld [vmem:[#allocation4 + $0x38] sm:$0xff]
      %v85 = vld [vmem:[#allocation2] sm:$0xff]
      %86 = vmatpush.xpose.msra.mxu0 0.0
      %87 = vmatpush.xpose.msra.mxu0 0.0
      %88 = vmatpush.xpose.msra.mxu0 0.0
      %89 = vmatpush.xpose.msra.mxu0 0.0
      %90 = vmatpush.xpose.msra.mxu0 0.0
      %91 = vmatpush.xpose.msra.mxu0 0.0
      %92 = vmatpush.xpose.msra.mxu0 0.0
      %93 = vmatpush.xpose.msra.mxu0 0.0
      %94 = vmatpush.xpose.msra.mxu0 0.0
      %95 = vmatpush.xpose.msra.mxu0 0.0
      %96 = vmatpush.xpose.msra.mxu0 0.0
      %97 = vmatpush.xpose.msra.mxu0 0.0
      %98 = vmatpush.xpose.msra.mxu0 0.0
      %99 = vmatpush.xpose.msra.mxu0 0.0
      %100 = vmatpush.xpose.msra.mxu0 0.0
      %v101 = vand.u32 %v77, 4294901760
      %102 = vmatpush.xpose.msra.mxu0 %v101
      %v103 = vand.u32 %v77, 4294901760
      %v104 = vsub.f32 %v77, %v103
      %v105 = vand.u32 %v104, 4294901760
      %v106 = vsub.f32 %v104, %v105
      %v107 = vand.u32 %v106, 4294901760
      %108 = vmatmul.f32.gmra.mxu0 %v107
      %v109 = vpop.f32.mrf.mxu0
      %v110 = vadd.f32 0.0, %v109
      %111 = vdwg.mxu0
      %112 = vmatpush.xpose.msra.mxu0 0.0
      %113 = vmatpush.xpose.msra.mxu0 0.0
      %114 = vmatpush.xpose.msra.mxu0 0.0
      %115 = vmatpush.xpose.msra.mxu0 0.0
      %116 = vmatpush.xpose.msra.mxu0 0.0
      %117 = vmatpush.xpose.msra.mxu0 0.0
      %118 = vmatpush.xpose.msra.mxu0 0.0
      %119 = vmatpush.xpose.msra.mxu0 0.0
      %120 = vmatpush.xpose.msra.mxu0 0.0
      %121 = vmatpush.xpose.msra.mxu0 0.0
      %122 = vmatpush.xpose.msra.mxu0 0.0
      %123 = vmatpush.xpose.msra.mxu0 0.0
      %124 = vmatpush.xpose.msra.mxu0 0.0
      %125 = vmatpush.xpose.msra.mxu0 0.0
      %126 = vmatpush.xpose.msra.mxu0 0.0
      %v127 = vand.u32 %v77, 4294901760
      %v128 = vsub.f32 %v77, %v127
      %v129 = vand.u32 %v128, 4294901760
      %v130 = vsub.f32 %v128, %v129
      %v131 = vand.u32 %v130, 4294901760
      %132 = vmatpush.xpose.msra.mxu0 %v131
      %v133 = vand.u32 %v77, 4294901760
      %134 = vmatmul.f32.gmra.mxu0 %v133
      %v135 = vpop.f32.mrf.mxu0
      %v136 = vadd.f32 %v110, %v135
      %137 = vdwg.mxu0
      %138 = vmatpush.xpose.msra.mxu0 0.0
      %139 = vmatpush.xpose.msra.mxu0 0.0
      %140 = vmatpush.xpose.msra.mxu0 0.0
      %141 = vmatpush.xpose.msra.mxu0 0.0
      %142 = vmatpush.xpose.msra.mxu0 0.0
      %143 = vmatpush.xpose.msra.mxu0 0.0
      %144 = vmatpush.xpose.msra.mxu0 0.0
      %145 = vmatpush.xpose.msra.mxu0 0.0
      %146 = vmatpush.xpose.msra.mxu0 0.0
      %147 = vmatpush.xpose.msra.mxu0 0.0
      %148 = vmatpush.xpose.msra.mxu0 0.0
      %149 = vmatpush.xpose.msra.mxu0 0.0
      %150 = vmatpush.xpose.msra.mxu0 0.0
      %151 = vmatpush.xpose.msra.mxu0 0.0
      %152 = vmatpush.xpose.msra.mxu0 0.0
      %v153 = vand.u32 %v77, 4294901760
      %v154 = vsub.f32 %v77, %v153
      %155 = vmatpush.xpose.msra.mxu0 %v154
      %v156 = vand.u32 %v77, 4294901760
      %v157 = vsub.f32 %v77, %v156
      %158 = vmatmul.f32.gmra.mxu0 %v157
      %v159 = vpop.f32.mrf.mxu0
      %v160 = vadd.f32 %v136, %v159
      %161 = vdwg.mxu0
      %162 = vmatpush.xpose.msra.mxu0 0.0
      %163 = vmatpush.xpose.msra.mxu0 0.0
      %164 = vmatpush.xpose.msra.mxu0 0.0
      %165 = vmatpush.xpose.msra.mxu0 0.0
      %166 = vmatpush.xpose.msra.mxu0 0.0
      %167 = vmatpush.xpose.msra.mxu0 0.0
      %168 = vmatpush.xpose.msra.mxu0 0.0
      %169 = vmatpush.xpose.msra.mxu0 0.0
      %170 = vmatpush.xpose.msra.mxu0 0.0
      %171 = vmatpush.xpose.msra.mxu0 0.0
      %172 = vmatpush.xpose.msra.mxu0 0.0
      %173 = vmatpush.xpose.msra.mxu0 0.0
      %174 = vmatpush.xpose.msra.mxu0 0.0
      %175 = vmatpush.xpose.msra.mxu0 0.0
      %176 = vmatpush.xpose.msra.mxu0 0.0
      %v177 = vand.u32 %v77, 4294901760
      %178 = vmatpush.xpose.msra.mxu0 %v177
      %v179 = vand.u32 %v77, 4294901760
      %v180 = vsub.f32 %v77, %v179
      %v181 = vand.u32 %v180, 4294901760
      %182 = vmatmul.f32.gmra.mxu0 %v181
      %v183 = vpop.f32.mrf.mxu0
      %v184 = vadd.f32 %v160, %v183
      %185 = vdwg.mxu0
      %186 = vmatpush.xpose.msra.mxu0 0.0
      %187 = vmatpush.xpose.msra.mxu0 0.0
      %188 = vmatpush.xpose.msra.mxu0 0.0
      %189 = vmatpush.xpose.msra.mxu0 0.0
      %190 = vmatpush.xpose.msra.mxu0 0.0
      %191 = vmatpush.xpose.msra.mxu0 0.0
      %192 = vmatpush.xpose.msra.mxu0 0.0
      %193 = vmatpush.xpose.msra.mxu0 0.0
      %194 = vmatpush.xpose.msra.mxu0 0.0
      %195 = vmatpush.xpose.msra.mxu0 0.0
      %196 = vmatpush.xpose.msra.mxu0 0.0
      %197 = vmatpush.xpose.msra.mxu0 0.0
      %198 = vmatpush.xpose.msra.mxu0 0.0
      %199 = vmatpush.xpose.msra.mxu0 0.0
      %200 = vmatpush.xpose.msra.mxu0 0.0
      %v201 = vand.u32 %v77, 4294901760
      %v202 = vsub.f32 %v77, %v201
      %v203 = vand.u32 %v202, 4294901760
      %204 = vmatpush.xpose.msra.mxu0 %v203
      %v205 = vand.u32 %v77, 4294901760
      %206 = vmatmul.f32.gmra.mxu0 %v205
      %v207 = vpop.f32.mrf.mxu0
      %v208 = vadd.f32 %v184, %v207
      %209 = vdwg.mxu0
      %210 = vmatpush.xpose.msra.mxu0 0.0
      %211 = vmatpush.xpose.msra.mxu0 0.0
      %212 = vmatpush.xpose.msra.mxu0 0.0
      %213 = vmatpush.xpose.msra.mxu0 0.0
      %214 = vmatpush.xpose.msra.mxu0 0.0
      %215 = vmatpush.xpose.msra.mxu0 0.0
      %216 = vmatpush.xpose.msra.mxu0 0.0
      %217 = vmatpush.xpose.msra.mxu0 0.0
      %218 = vmatpush.xpose.msra.mxu0 0.0
      %219 = vmatpush.xpose.msra.mxu0 0.0
      %220 = vmatpush.xpose.msra.mxu0 0.0
      %221 = vmatpush.xpose.msra.mxu0 0.0
      %222 = vmatpush.xpose.msra.mxu0 0.0
      %223 = vmatpush.xpose.msra.mxu0 0.0
      %224 = vmatpush.xpose.msra.mxu0 0.0
      %v225 = vand.u32 %v77, 4294901760
      %226 = vmatpush.xpose.msra.mxu0 %v225
      %v227 = vand.u32 %v77, 4294901760
      %228 = vmatmul.f32.gmra.mxu0 %v227
      %v229 = vpop.f32.mrf.mxu0
      %v230 = vadd.f32 %v208, %v229
      %231 = vdwg.mxu0
      %232 = vmatpush.xpose.msra.mxu0 0.0
      %233 = vmatpush.xpose.msra.mxu0 0.0
      %234 = vmatpush.xpose.msra.mxu0 0.0
      %235 = vmatpush.xpose.msra.mxu0 0.0
      %236 = vmatpush.xpose.msra.mxu0 0.0
      %237 = vmatpush.xpose.msra.mxu0 0.0
      %238 = vmatpush.xpose.msra.mxu0 0.0
      %239 = vmatpush.xpose.msra.mxu0 0.0
      %240 = vmatpush.xpose.msra.mxu0 0.0
      %241 = vmatpush.xpose.msra.mxu0 0.0
      %242 = vmatpush.xpose.msra.mxu0 0.0
      %243 = vmatpush.xpose.msra.mxu0 0.0
      %244 = vmatpush.xpose.msra.mxu0 0.0
      %245 = vmatpush.xpose.msra.mxu0 0.0
      %246 = vmatpush.xpose.msra.mxu0 0.0
      %v247 = vand.u32 %v78, 4294901760
      %248 = vmatpush.xpose.msra.mxu0 %v247
      %v249 = vand.u32 %v78, 4294901760
      %v250 = vsub.f32 %v78, %v249
      %v251 = vand.u32 %v250, 4294901760
      %v252 = vsub.f32 %v250, %v251
      %v253 = vand.u32 %v252, 4294901760
      %254 = vmatmul.f32.gmra.mxu0 %v253
      %v255 = vpop.f32.mrf.mxu0
      %v256 = vadd.f32 %v230, %v255
      %257 = vdwg.mxu0
      %258 = vmatpush.xpose.msra.mxu0 0.0
      %259 = vmatpush.xpose.msra.mxu0 0.0
      %260 = vmatpush.xpose.msra.mxu0 0.0
      %261 = vmatpush.xpose.msra.mxu0 0.0
      %262 = vmatpush.xpose.msra.mxu0 0.0
      %263 = vmatpush.xpose.msra.mxu0 0.0
      %264 = vmatpush.xpose.msra.mxu0 0.0
      %265 = vmatpush.xpose.msra.mxu0 0.0
      %266 = vmatpush.xpose.msra.mxu0 0.0
      %267 = vmatpush.xpose.msra.mxu0 0.0
      %268 = vmatpush.xpose.msra.mxu0 0.0
      %269 = vmatpush.xpose.msra.mxu0 0.0
      %270 = vmatpush.xpose.msra.mxu0 0.0
      %271 = vmatpush.xpose.msra.mxu0 0.0
      %272 = vmatpush.xpose.msra.mxu0 0.0
      %v273 = vand.u32 %v78, 4294901760
      %v274 = vsub.f32 %v78, %v273
      %v275 = vand.u32 %v274, 4294901760
      %v276 = vsub.f32 %v274, %v275
      %v277 = vand.u32 %v276, 4294901760
      %278 = vmatpush.xpose.msra.mxu0 %v277
      %v279 = vand.u32 %v78, 4294901760
      %280 = vmatmul.f32.gmra.mxu0 %v279
      %v281 = vpop.f32.mrf.mxu0
      %v282 = vadd.f32 %v256, %v281
      %283 = vdwg.mxu0
      %284 = vmatpush.xpose.msra.mxu0 0.0
      %285 = vmatpush.xpose.msra.mxu0 0.0
      %286 = vmatpush.xpose.msra.mxu0 0.0
      %287 = vmatpush.xpose.msra.mxu0 0.0
      %288 = vmatpush.xpose.msra.mxu0 0.0
      %289 = vmatpush.xpose.msra.mxu0 0.0
      %290 = vmatpush.xpose.msra.mxu0 0.0
      %291 = vmatpush.xpose.msra.mxu0 0.0
      %292 = vmatpush.xpose.msra.mxu0 0.0
      %293 = vmatpush.xpose.msra.mxu0 0.0
      %294 = vmatpush.xpose.msra.mxu0 0.0
      %295 = vmatpush.xpose.msra.mxu0 0.0
      %296 = vmatpush.xpose.msra.mxu0 0.0
      %297 = vmatpush.xpose.msra.mxu0 0.0
      %298 = vmatpush.xpose.msra.mxu0 0.0
      %v299 = vand.u32 %v78, 4294901760
      %v300 = vsub.f32 %v78, %v299
      %301 = vmatpush.xpose.msra.mxu0 %v300
      %v302 = vand.u32 %v78, 4294901760
      %v303 = vsub.f32 %v78, %v302
      %304 = vmatmul.f32.gmra.mxu0 %v303
      %v305 = vpop.f32.mrf.mxu0
      %v306 = vadd.f32 %v282, %v305
      %307 = vdwg.mxu0
      %308 = vmatpush.xpose.msra.mxu0 0.0
      %309 = vmatpush.xpose.msra.mxu0 0.0
      %310 = vmatpush.xpose.msra.mxu0 0.0
      %311 = vmatpush.xpose.msra.mxu0 0.0
      %312 = vmatpush.xpose.msra.mxu0 0.0
      %313 = vmatpush.xpose.msra.mxu0 0.0
      %314 = vmatpush.xpose.msra.mxu0 0.0
      %315 = vmatpush.xpose.msra.mxu0 0.0
      %316 = vmatpush.xpose.msra.mxu0 0.0
      %317 = vmatpush.xpose.msra.mxu0 0.0
      %318 = vmatpush.xpose.msra.mxu0 0.0
      %319 = vmatpush.xpose.msra.mxu0 0.0
      %320 = vmatpush.xpose.msra.mxu0 0.0
      %321 = vmatpush.xpose.msra.mxu0 0.0
      %322 = vmatpush.xpose.msra.mxu0 0.0
      %v323 = vand.u32 %v78, 4294901760
      %324 = vmatpush.xpose.msra.mxu0 %v323
      %v325 = vand.u32 %v78, 4294901760
      %v326 = vsub.f32 %v78, %v325
      %v327 = vand.u32 %v326, 4294901760
      %328 = vmatmul.f32.gmra.mxu0 %v327
      %v329 = vpop.f32.mrf.mxu0
      %v330 = vadd.f32 %v306, %v329
      %331 = vdwg.mxu0
      %332 = vmatpush.xpose.msra.mxu0 0.0
      %333 = vmatpush.xpose.msra.mxu0 0.0
      %334 = vmatpush.xpose.msra.mxu0 0.0
      %335 = vmatpush.xpose.msra.mxu0 0.0
      %336 = vmatpush.xpose.msra.mxu0 0.0
      %337 = vmatpush.xpose.msra.mxu0 0.0
      %338 = vmatpush.xpose.msra.mxu0 0.0
      %339 = vmatpush.xpose.msra.mxu0 0.0
      %340 = vmatpush.xpose.msra.mxu0 0.0
      %341 = vmatpush.xpose.msra.mxu0 0.0
      %342 = vmatpush.xpose.msra.mxu0 0.0
      %343 = vmatpush.xpose.msra.mxu0 0.0
      %344 = vmatpush.xpose.msra.mxu0 0.0
      %345 = vmatpush.xpose.msra.mxu0 0.0
      %346 = vmatpush.xpose.msra.mxu0 0.0
      %v347 = vand.u32 %v78, 4294901760
      %v348 = vsub.f32 %v78, %v347
      %v349 = vand.u32 %v348, 4294901760
      %350 = vmatpush.xpose.msra.mxu0 %v349
      %v351 = vand.u32 %v78, 4294901760
      %352 = vmatmul.f32.gmra.mxu0 %v351
      %v353 = vpop.f32.mrf.mxu0
      %v354 = vadd.f32 %v330, %v353
      %355 = vdwg.mxu0
      %356 = vmatpush.xpose.msra.mxu0 0.0
      %357 = vmatpush.xpose.msra.mxu0 0.0
      %358 = vmatpush.xpose.msra.mxu0 0.0
      %359 = vmatpush.xpose.msra.mxu0 0.0
      %360 = vmatpush.xpose.msra.mxu0 0.0
      %361 = vmatpush.xpose.msra.mxu0 0.0
      %362 = vmatpush.xpose.msra.mxu0 0.0
      %363 = vmatpush.xpose.msra.mxu0 0.0
      %364 = vmatpush.xpose.msra.mxu0 0.0
      %365 = vmatpush.xpose.msra.mxu0 0.0
      %366 = vmatpush.xpose.msra.mxu0 0.0
      %367 = vmatpush.xpose.msra.mxu0 0.0
      %368 = vmatpush.xpose.msra.mxu0 0.0
      %369 = vmatpush.xpose.msra.mxu0 0.0
      %370 = vmatpush.xpose.msra.mxu0 0.0
      %v371 = vand.u32 %v78, 4294901760
      %372 = vmatpush.xpose.msra.mxu0 %v371
      %v373 = vand.u32 %v78, 4294901760
      %374 = vmatmul.f32.gmra.mxu0 %v373
      %v375 = vpop.f32.mrf.mxu0
      %v376 = vadd.f32 %v354, %v375
      %377 = vdwg.mxu0
      %378 = vmatpush.xpose.msra.mxu0 0.0
      %379 = vmatpush.xpose.msra.mxu0 0.0
      %380 = vmatpush.xpose.msra.mxu0 0.0
      %381 = vmatpush.xpose.msra.mxu0 0.0
      %382 = vmatpush.xpose.msra.mxu0 0.0
      %383 = vmatpush.xpose.msra.mxu0 0.0
      %384 = vmatpush.xpose.msra.mxu0 0.0
      %385 = vmatpush.xpose.msra.mxu0 0.0
      %386 = vmatpush.xpose.msra.mxu0 0.0
      %387 = vmatpush.xpose.msra.mxu0 0.0
      %388 = vmatpush.xpose.msra.mxu0 0.0
      %389 = vmatpush.xpose.msra.mxu0 0.0
      %390 = vmatpush.xpose.msra.mxu0 0.0
      %391 = vmatpush.xpose.msra.mxu0 0.0
      %392 = vmatpush.xpose.msra.mxu0 0.0
      %v393 = vand.u32 %v79, 4294901760
      %394 = vmatpush.xpose.msra.mxu0 %v393
      %v395 = vand.u32 %v79, 4294901760
      %v396 = vsub.f32 %v79, %v395
      %v397 = vand.u32 %v396, 4294901760
      %v398 = vsub.f32 %v396, %v397
      %v399 = vand.u32 %v398, 4294901760
      %400 = vmatmul.f32.gmra.mxu0 %v399
      %v401 = vpop.f32.mrf.mxu0
      %v402 = vadd.f32 %v376, %v401
      %403 = vdwg.mxu0
      %404 = vmatpush.xpose.msra.mxu0 0.0
      %405 = vmatpush.xpose.msra.mxu0 0.0
      %406 = vmatpush.xpose.msra.mxu0 0.0
      %407 = vmatpush.xpose.msra.mxu0 0.0
      %408 = vmatpush.xpose.msra.mxu0 0.0
      %409 = vmatpush.xpose.msra.mxu0 0.0
      %410 = vmatpush.xpose.msra.mxu0 0.0
      %411 = vmatpush.xpose.msra.mxu0 0.0
      %412 = vmatpush.xpose.msra.mxu0 0.0
      %413 = vmatpush.xpose.msra.mxu0 0.0
      %414 = vmatpush.xpose.msra.mxu0 0.0
      %415 = vmatpush.xpose.msra.mxu0 0.0
      %416 = vmatpush.xpose.msra.mxu0 0.0
      %417 = vmatpush.xpose.msra.mxu0 0.0
      %418 = vmatpush.xpose.msra.mxu0 0.0
      %v419 = vand.u32 %v79, 4294901760
      %v420 = vsub.f32 %v79, %v419
      %v421 = vand.u32 %v420, 4294901760
      %v422 = vsub.f32 %v420, %v421
      %v423 = vand.u32 %v422, 4294901760
      %424 = vmatpush.xpose.msra.mxu0 %v423
      %v425 = vand.u32 %v79, 4294901760
      %426 = vmatmul.f32.gmra.mxu0 %v425
      %v427 = vpop.f32.mrf.mxu0
      %v428 = vadd.f32 %v402, %v427
      %429 = vdwg.mxu0
      %430 = vmatpush.xpose.msra.mxu0 0.0
      %431 = vmatpush.xpose.msra.mxu0 0.0
      %432 = vmatpush.xpose.msra.mxu0 0.0
      %433 = vmatpush.xpose.msra.mxu0 0.0
      %434 = vmatpush.xpose.msra.mxu0 0.0
      %435 = vmatpush.xpose.msra.mxu0 0.0
      %436 = vmatpush.xpose.msra.mxu0 0.0
      %437 = vmatpush.xpose.msra.mxu0 0.0
      %438 = vmatpush.xpose.msra.mxu0 0.0
      %439 = vmatpush.xpose.msra.mxu0 0.0
      %440 = vmatpush.xpose.msra.mxu0 0.0
      %441 = vmatpush.xpose.msra.mxu0 0.0
      %442 = vmatpush.xpose.msra.mxu0 0.0
      %443 = vmatpush.xpose.msra.mxu0 0.0
      %444 = vmatpush.xpose.msra.mxu0 0.0
      %v445 = vand.u32 %v79, 4294901760
      %v446 = vsub.f32 %v79, %v445
      %447 = vmatpush.xpose.msra.mxu0 %v446
      %v448 = vand.u32 %v79, 4294901760
      %v449 = vsub.f32 %v79, %v448
      %450 = vmatmul.f32.gmra.mxu0 %v449
      %v451 = vpop.f32.mrf.mxu0
      %v452 = vadd.f32 %v428, %v451
      %453 = vdwg.mxu0
      %454 = vmatpush.xpose.msra.mxu0 0.0
      %455 = vmatpush.xpose.msra.mxu0 0.0
      %456 = vmatpush.xpose.msra.mxu0 0.0
      %457 = vmatpush.xpose.msra.mxu0 0.0
      %458 = vmatpush.xpose.msra.mxu0 0.0
      %459 = vmatpush.xpose.msra.mxu0 0.0
      %460 = vmatpush.xpose.msra.mxu0 0.0
      %461 = vmatpush.xpose.msra.mxu0 0.0
      %462 = vmatpush.xpose.msra.mxu0 0.0
      %463 = vmatpush.xpose.msra.mxu0 0.0
      %464 = vmatpush.xpose.msra.mxu0 0.0
      %465 = vmatpush.xpose.msra.mxu0 0.0
      %466 = vmatpush.xpose.msra.mxu0 0.0
      %467 = vmatpush.xpose.msra.mxu0 0.0
      %468 = vmatpush.xpose.msra.mxu0 0.0
      %v469 = vand.u32 %v79, 4294901760
      %470 = vmatpush.xpose.msra.mxu0 %v469
      %v471 = vand.u32 %v79, 4294901760
      %v472 = vsub.f32 %v79, %v471
      %v473 = vand.u32 %v472, 4294901760
      %474 = vmatmul.f32.gmra.mxu0 %v473
      %v475 = vpop.f32.mrf.mxu0
      %v476 = vadd.f32 %v452, %v475
      %477 = vdwg.mxu0
      %478 = vmatpush.xpose.msra.mxu0 0.0
      %479 = vmatpush.xpose.msra.mxu0 0.0
      %480 = vmatpush.xpose.msra.mxu0 0.0
      %481 = vmatpush.xpose.msra.mxu0 0.0
      %482 = vmatpush.xpose.msra.mxu0 0.0
      %483 = vmatpush.xpose.msra.mxu0 0.0
      %484 = vmatpush.xpose.msra.mxu0 0.0
      %485 = vmatpush.xpose.msra.mxu0 0.0
      %486 = vmatpush.xpose.msra.mxu0 0.0
      %487 = vmatpush.xpose.msra.mxu0 0.0
      %488 = vmatpush.xpose.msra.mxu0 0.0
      %489 = vmatpush.xpose.msra.mxu0 0.0
      %490 = vmatpush.xpose.msra.mxu0 0.0
      %491 = vmatpush.xpose.msra.mxu0 0.0
      %492 = vmatpush.xpose.msra.mxu0 0.0
      %v493 = vand.u32 %v79, 4294901760
      %v494 = vsub.f32 %v79, %v493
      %v495 = vand.u32 %v494, 4294901760
      %496 = vmatpush.xpose.msra.mxu0 %v495
      %v497 = vand.u32 %v79, 4294901760
      %498 = vmatmul.f32.gmra.mxu0 %v497
      %v499 = vpop.f32.mrf.mxu0
      %v500 = vadd.f32 %v476, %v499
      %501 = vdwg.mxu0
      %502 = vmatpush.xpose.msra.mxu0 0.0
      %503 = vmatpush.xpose.msra.mxu0 0.0
      %504 = vmatpush.xpose.msra.mxu0 0.0
      %505 = vmatpush.xpose.msra.mxu0 0.0
      %506 = vmatpush.xpose.msra.mxu0 0.0
      %507 = vmatpush.xpose.msra.mxu0 0.0
      %508 = vmatpush.xpose.msra.mxu0 0.0
      %509 = vmatpush.xpose.msra.mxu0 0.0
      %510 = vmatpush.xpose.msra.mxu0 0.0
      %511 = vmatpush.xpose.msra.mxu0 0.0
      %512 = vmatpush.xpose.msra.mxu0 0.0
      %513 = vmatpush.xpose.msra.mxu0 0.0
      %514 = vmatpush.xpose.msra.mxu0 0.0
      %515 = vmatpush.xpose.msra.mxu0 0.0
      %516 = vmatpush.xpose.msra.mxu0 0.0
      %v517 = vand.u32 %v79, 4294901760
      %518 = vmatpush.xpose.msra.mxu0 %v517
      %v519 = vand.u32 %v79, 4294901760
      %520 = vmatmul.f32.gmra.mxu0 %v519
      %v521 = vpop.f32.mrf.mxu0
      %v522 = vadd.f32 %v500, %v521
      %523 = vdwg.mxu0
      %524 = vmatpush.xpose.msra.mxu0 0.0
      %525 = vmatpush.xpose.msra.mxu0 0.0
      %526 = vmatpush.xpose.msra.mxu0 0.0
      %527 = vmatpush.xpose.msra.mxu0 0.0
      %528 = vmatpush.xpose.msra.mxu0 0.0
      %529 = vmatpush.xpose.msra.mxu0 0.0
      %530 = vmatpush.xpose.msra.mxu0 0.0
      %531 = vmatpush.xpose.msra.mxu0 0.0
      %532 = vmatpush.xpose.msra.mxu0 0.0
      %533 = vmatpush.xpose.msra.mxu0 0.0
      %534 = vmatpush.xpose.msra.mxu0 0.0
      %535 = vmatpush.xpose.msra.mxu0 0.0
      %536 = vmatpush.xpose.msra.mxu0 0.0
      %537 = vmatpush.xpose.msra.mxu0 0.0
      %538 = vmatpush.xpose.msra.mxu0 0.0
      %v539 = vand.u32 %v80, 4294901760
      %540 = vmatpush.xpose.msra.mxu0 %v539
      %v541 = vand.u32 %v80, 4294901760
      %v542 = vsub.f32 %v80, %v541
      %v543 = vand.u32 %v542, 4294901760
      %v544 = vsub.f32 %v542, %v543
      %v545 = vand.u32 %v544, 4294901760
      %546 = vmatmul.f32.gmra.mxu0 %v545
      %v547 = vpop.f32.mrf.mxu0
      %v548 = vadd.f32 %v522, %v547
      %549 = vdwg.mxu0
      %550 = vmatpush.xpose.msra.mxu0 0.0
      %551 = vmatpush.xpose.msra.mxu0 0.0
      %552 = vmatpush.xpose.msra.mxu0 0.0
      %553 = vmatpush.xpose.msra.mxu0 0.0
      %554 = vmatpush.xpose.msra.mxu0 0.0
      %555 = vmatpush.xpose.msra.mxu0 0.0
      %556 = vmatpush.xpose.msra.mxu0 0.0
      %557 = vmatpush.xpose.msra.mxu0 0.0
      %558 = vmatpush.xpose.msra.mxu0 0.0
      %559 = vmatpush.xpose.msra.mxu0 0.0
      %560 = vmatpush.xpose.msra.mxu0 0.0
      %561 = vmatpush.xpose.msra.mxu0 0.0
      %562 = vmatpush.xpose.msra.mxu0 0.0
      %563 = vmatpush.xpose.msra.mxu0 0.0
      %564 = vmatpush.xpose.msra.mxu0 0.0
      %v565 = vand.u32 %v80, 4294901760
      %v566 = vsub.f32 %v80, %v565
      %v567 = vand.u32 %v566, 4294901760
      %v568 = vsub.f32 %v566, %v567
      %v569 = vand.u32 %v568, 4294901760
      %570 = vmatpush.xpose.msra.mxu0 %v569
      %v571 = vand.u32 %v80, 4294901760
      %572 = vmatmul.f32.gmra.mxu0 %v571
      %v573 = vpop.f32.mrf.mxu0
      %v574 = vadd.f32 %v548, %v573
      %575 = vdwg.mxu0
      %576 = vmatpush.xpose.msra.mxu0 0.0
      %577 = vmatpush.xpose.msra.mxu0 0.0
      %578 = vmatpush.xpose.msra.mxu0 0.0
      %579 = vmatpush.xpose.msra.mxu0 0.0
      %580 = vmatpush.xpose.msra.mxu0 0.0
      %581 = vmatpush.xpose.msra.mxu0 0.0
      %582 = vmatpush.xpose.msra.mxu0 0.0
      %583 = vmatpush.xpose.msra.mxu0 0.0
      %584 = vmatpush.xpose.msra.mxu0 0.0
      %585 = vmatpush.xpose.msra.mxu0 0.0
      %586 = vmatpush.xpose.msra.mxu0 0.0
      %587 = vmatpush.xpose.msra.mxu0 0.0
      %588 = vmatpush.xpose.msra.mxu0 0.0
      %589 = vmatpush.xpose.msra.mxu0 0.0
      %590 = vmatpush.xpose.msra.mxu0 0.0
      %v591 = vand.u32 %v80, 4294901760
      %v592 = vsub.f32 %v80, %v591
      %593 = vmatpush.xpose.msra.mxu0 %v592
      %v594 = vand.u32 %v80, 4294901760
      %v595 = vsub.f32 %v80, %v594
      %596 = vmatmul.f32.gmra.mxu0 %v595
      %v597 = vpop.f32.mrf.mxu0
      %v598 = vadd.f32 %v574, %v597
      %599 = vdwg.mxu0
      %600 = vmatpush.xpose.msra.mxu0 0.0
      %601 = vmatpush.xpose.msra.mxu0 0.0
      %602 = vmatpush.xpose.msra.mxu0 0.0
      %603 = vmatpush.xpose.msra.mxu0 0.0
      %604 = vmatpush.xpose.msra.mxu0 0.0
      %605 = vmatpush.xpose.msra.mxu0 0.0
      %606 = vmatpush.xpose.msra.mxu0 0.0
      %607 = vmatpush.xpose.msra.mxu0 0.0
      %608 = vmatpush.xpose.msra.mxu0 0.0
      %609 = vmatpush.xpose.msra.mxu0 0.0
      %610 = vmatpush.xpose.msra.mxu0 0.0
      %611 = vmatpush.xpose.msra.mxu0 0.0
      %612 = vmatpush.xpose.msra.mxu0 0.0
      %613 = vmatpush.xpose.msra.mxu0 0.0
      %614 = vmatpush.xpose.msra.mxu0 0.0
      %v615 = vand.u32 %v80, 4294901760
      %616 = vmatpush.xpose.msra.mxu0 %v615
      %v617 = vand.u32 %v80, 4294901760
      %v618 = vsub.f32 %v80, %v617
      %v619 = vand.u32 %v618, 4294901760
      %620 = vmatmul.f32.gmra.mxu0 %v619
      %v621 = vpop.f32.mrf.mxu0
      %v622 = vadd.f32 %v598, %v621
      %623 = vdwg.mxu0
      %624 = vmatpush.xpose.msra.mxu0 0.0
      %625 = vmatpush.xpose.msra.mxu0 0.0
      %626 = vmatpush.xpose.msra.mxu0 0.0
      %627 = vmatpush.xpose.msra.mxu0 0.0
      %628 = vmatpush.xpose.msra.mxu0 0.0
      %629 = vmatpush.xpose.msra.mxu0 0.0
      %630 = vmatpush.xpose.msra.mxu0 0.0
      %631 = vmatpush.xpose.msra.mxu0 0.0
      %632 = vmatpush.xpose.msra.mxu0 0.0
      %633 = vmatpush.xpose.msra.mxu0 0.0
      %634 = vmatpush.xpose.msra.mxu0 0.0
      %635 = vmatpush.xpose.msra.mxu0 0.0
      %636 = vmatpush.xpose.msra.mxu0 0.0
      %637 = vmatpush.xpose.msra.mxu0 0.0
      %638 = vmatpush.xpose.msra.mxu0 0.0
      %v639 = vand.u32 %v80, 4294901760
      %v640 = vsub.f32 %v80, %v639
      %v641 = vand.u32 %v640, 4294901760
      %642 = vmatpush.xpose.msra.mxu0 %v641
      %v643 = vand.u32 %v80, 4294901760
      %644 = vmatmul.f32.gmra.mxu0 %v643
      %v645 = vpop.f32.mrf.mxu0
      %v646 = vadd.f32 %v622, %v645
      %647 = vdwg.mxu0
      %648 = vmatpush.xpose.msra.mxu0 0.0
      %649 = vmatpush.xpose.msra.mxu0 0.0
      %650 = vmatpush.xpose.msra.mxu0 0.0
      %651 = vmatpush.xpose.msra.mxu0 0.0
      %652 = vmatpush.xpose.msra.mxu0 0.0
      %653 = vmatpush.xpose.msra.mxu0 0.0
      %654 = vmatpush.xpose.msra.mxu0 0.0
      %655 = vmatpush.xpose.msra.mxu0 0.0
      %656 = vmatpush.xpose.msra.mxu0 0.0
      %657 = vmatpush.xpose.msra.mxu0 0.0
      %658 = vmatpush.xpose.msra.mxu0 0.0
      %659 = vmatpush.xpose.msra.mxu0 0.0
      %660 = vmatpush.xpose.msra.mxu0 0.0
      %661 = vmatpush.xpose.msra.mxu0 0.0
      %662 = vmatpush.xpose.msra.mxu0 0.0
      %v663 = vand.u32 %v80, 4294901760
      %664 = vmatpush.xpose.msra.mxu0 %v663
      %v665 = vand.u32 %v80, 4294901760
      %666 = vmatmul.f32.gmra.mxu0 %v665
      %v667 = vpop.f32.mrf.mxu0
      %v668 = vadd.f32 %v646, %v667
      %669 = vdwg.mxu0
      %670 = vmatpush.xpose.msra.mxu0 0.0
      %671 = vmatpush.xpose.msra.mxu0 0.0
      %672 = vmatpush.xpose.msra.mxu0 0.0
      %673 = vmatpush.xpose.msra.mxu0 0.0
      %674 = vmatpush.xpose.msra.mxu0 0.0
      %675 = vmatpush.xpose.msra.mxu0 0.0
      %676 = vmatpush.xpose.msra.mxu0 0.0
      %677 = vmatpush.xpose.msra.mxu0 0.0
      %678 = vmatpush.xpose.msra.mxu0 0.0
      %679 = vmatpush.xpose.msra.mxu0 0.0
      %680 = vmatpush.xpose.msra.mxu0 0.0
      %681 = vmatpush.xpose.msra.mxu0 0.0
      %682 = vmatpush.xpose.msra.mxu0 0.0
      %683 = vmatpush.xpose.msra.mxu0 0.0
      %684 = vmatpush.xpose.msra.mxu0 0.0
      %v685 = vand.u32 %v81, 4294901760
      %686 = vmatpush.xpose.msra.mxu0 %v685
      %v687 = vand.u32 %v81, 4294901760
      %v688 = vsub.f32 %v81, %v687
      %v689 = vand.u32 %v688, 4294901760
      %v690 = vsub.f32 %v688, %v689
      %v691 = vand.u32 %v690, 4294901760
      %692 = vmatmul.f32.gmra.mxu0 %v691
      %v693 = vpop.f32.mrf.mxu0
      %v694 = vadd.f32 %v668, %v693
      %695 = vdwg.mxu0
      %696 = vmatpush.xpose.msra.mxu0 0.0
      %697 = vmatpush.xpose.msra.mxu0 0.0
      %698 = vmatpush.xpose.msra.mxu0 0.0
      %699 = vmatpush.xpose.msra.mxu0 0.0
      %700 = vmatpush.xpose.msra.mxu0 0.0
      %701 = vmatpush.xpose.msra.mxu0 0.0
      %702 = vmatpush.xpose.msra.mxu0 0.0
      %703 = vmatpush.xpose.msra.mxu0 0.0
      %704 = vmatpush.xpose.msra.mxu0 0.0
      %705 = vmatpush.xpose.msra.mxu0 0.0
      %706 = vmatpush.xpose.msra.mxu0 0.0
      %707 = vmatpush.xpose.msra.mxu0 0.0
      %708 = vmatpush.xpose.msra.mxu0 0.0
      %709 = vmatpush.xpose.msra.mxu0 0.0
      %710 = vmatpush.xpose.msra.mxu0 0.0
      %v711 = vand.u32 %v81, 4294901760
      %v712 = vsub.f32 %v81, %v711
      %v713 = vand.u32 %v712, 4294901760
      %v714 = vsub.f32 %v712, %v713
      %v715 = vand.u32 %v714, 4294901760
      %716 = vmatpush.xpose.msra.mxu0 %v715
      %v717 = vand.u32 %v81, 4294901760
      %718 = vmatmul.f32.gmra.mxu0 %v717
      %v719 = vpop.f32.mrf.mxu0
      %v720 = vadd.f32 %v694, %v719
      %721 = vdwg.mxu0
      %722 = vmatpush.xpose.msra.mxu0 0.0
      %723 = vmatpush.xpose.msra.mxu0 0.0
      %724 = vmatpush.xpose.msra.mxu0 0.0
      %725 = vmatpush.xpose.msra.mxu0 0.0
      %726 = vmatpush.xpose.msra.mxu0 0.0
      %727 = vmatpush.xpose.msra.mxu0 0.0
      %728 = vmatpush.xpose.msra.mxu0 0.0
      %729 = vmatpush.xpose.msra.mxu0 0.0
      %730 = vmatpush.xpose.msra.mxu0 0.0
      %731 = vmatpush.xpose.msra.mxu0 0.0
      %732 = vmatpush.xpose.msra.mxu0 0.0
      %733 = vmatpush.xpose.msra.mxu0 0.0
      %734 = vmatpush.xpose.msra.mxu0 0.0
      %735 = vmatpush.xpose.msra.mxu0 0.0
      %736 = vmatpush.xpose.msra.mxu0 0.0
      %v737 = vand.u32 %v81, 4294901760
      %v738 = vsub.f32 %v81, %v737
      %739 = vmatpush.xpose.msra.mxu0 %v738
      %v740 = vand.u32 %v81, 4294901760
      %v741 = vsub.f32 %v81, %v740
      %742 = vmatmul.f32.gmra.mxu0 %v741
      %v743 = vpop.f32.mrf.mxu0
      %v744 = vadd.f32 %v720, %v743
      %745 = vdwg.mxu0
      %746 = vmatpush.xpose.msra.mxu0 0.0
      %747 = vmatpush.xpose.msra.mxu0 0.0
      %748 = vmatpush.xpose.msra.mxu0 0.0
      %749 = vmatpush.xpose.msra.mxu0 0.0
      %750 = vmatpush.xpose.msra.mxu0 0.0
      %751 = vmatpush.xpose.msra.mxu0 0.0
      %752 = vmatpush.xpose.msra.mxu0 0.0
      %753 = vmatpush.xpose.msra.mxu0 0.0
      %754 = vmatpush.xpose.msra.mxu0 0.0
      %755 = vmatpush.xpose.msra.mxu0 0.0
      %756 = vmatpush.xpose.msra.mxu0 0.0
      %757 = vmatpush.xpose.msra.mxu0 0.0
      %758 = vmatpush.xpose.msra.mxu0 0.0
      %759 = vmatpush.xpose.msra.mxu0 0.0
      %760 = vmatpush.xpose.msra.mxu0 0.0
      %v761 = vand.u32 %v81, 4294901760
      %762 = vmatpush.xpose.msra.mxu0 %v761
      %v763 = vand.u32 %v81, 4294901760
      %v764 = vsub.f32 %v81, %v763
      %v765 = vand.u32 %v764, 4294901760
      %766 = vmatmul.f32.gmra.mxu0 %v765
      %v767 = vpop.f32.mrf.mxu0
      %v768 = vadd.f32 %v744, %v767
      %769 = vdwg.mxu0
      %770 = vmatpush.xpose.msra.mxu0 0.0
      %771 = vmatpush.xpose.msra.mxu0 0.0
      %772 = vmatpush.xpose.msra.mxu0 0.0
      %773 = vmatpush.xpose.msra.mxu0 0.0
      %774 = vmatpush.xpose.msra.mxu0 0.0
      %775 = vmatpush.xpose.msra.mxu0 0.0
      %776 = vmatpush.xpose.msra.mxu0 0.0
      %777 = vmatpush.xpose.msra.mxu0 0.0
      %778 = vmatpush.xpose.msra.mxu0 0.0
      %779 = vmatpush.xpose.msra.mxu0 0.0
      %780 = vmatpush.xpose.msra.mxu0 0.0
      %781 = vmatpush.xpose.msra.mxu0 0.0
      %782 = vmatpush.xpose.msra.mxu0 0.0
      %783 = vmatpush.xpose.msra.mxu0 0.0
      %784 = vmatpush.xpose.msra.mxu0 0.0
      %v785 = vand.u32 %v81, 4294901760
      %v786 = vsub.f32 %v81, %v785
      %v787 = vand.u32 %v786, 4294901760
      %788 = vmatpush.xpose.msra.mxu0 %v787
      %v789 = vand.u32 %v81, 4294901760
      %790 = vmatmul.f32.gmra.mxu0 %v789
      %v791 = vpop.f32.mrf.mxu0
      %v792 = vadd.f32 %v768, %v791
      %793 = vdwg.mxu0
      %794 = vmatpush.xpose.msra.mxu0 0.0
      %795 = vmatpush.xpose.msra.mxu0 0.0
      %796 = vmatpush.xpose.msra.mxu0 0.0
      %797 = vmatpush.xpose.msra.mxu0 0.0
      %798 = vmatpush.xpose.msra.mxu0 0.0
      %799 = vmatpush.xpose.msra.mxu0 0.0
      %800 = vmatpush.xpose.msra.mxu0 0.0
      %801 = vmatpush.xpose.msra.mxu0 0.0
      %802 = vmatpush.xpose.msra.mxu0 0.0
      %803 = vmatpush.xpose.msra.mxu0 0.0
      %804 = vmatpush.xpose.msra.mxu0 0.0
      %805 = vmatpush.xpose.msra.mxu0 0.0
      %806 = vmatpush.xpose.msra.mxu0 0.0
      %807 = vmatpush.xpose.msra.mxu0 0.0
      %808 = vmatpush.xpose.msra.mxu0 0.0
      %v809 = vand.u32 %v81, 4294901760
      %810 = vmatpush.xpose.msra.mxu0 %v809
      %v811 = vand.u32 %v81, 4294901760
      %812 = vmatmul.f32.gmra.mxu0 %v811
      %v813 = vpop.f32.mrf.mxu0
      %v814 = vadd.f32 %v792, %v813
      %815 = vdwg.mxu0
      %816 = vmatpush.xpose.msra.mxu0 0.0
      %817 = vmatpush.xpose.msra.mxu0 0.0
      %818 = vmatpush.xpose.msra.mxu0 0.0
      %819 = vmatpush.xpose.msra.mxu0 0.0
      %820 = vmatpush.xpose.msra.mxu0 0.0
      %821 = vmatpush.xpose.msra.mxu0 0.0
      %822 = vmatpush.xpose.msra.mxu0 0.0
      %823 = vmatpush.xpose.msra.mxu0 0.0
      %824 = vmatpush.xpose.msra.mxu0 0.0
      %825 = vmatpush.xpose.msra.mxu0 0.0
      %826 = vmatpush.xpose.msra.mxu0 0.0
      %827 = vmatpush.xpose.msra.mxu0 0.0
      %828 = vmatpush.xpose.msra.mxu0 0.0
      %829 = vmatpush.xpose.msra.mxu0 0.0
      %830 = vmatpush.xpose.msra.mxu0 0.0
      %v831 = vand.u32 %v82, 4294901760
      %832 = vmatpush.xpose.msra.mxu0 %v831
      %v833 = vand.u32 %v82, 4294901760
      %v834 = vsub.f32 %v82, %v833
      %v835 = vand.u32 %v834, 4294901760
      %v836 = vsub.f32 %v834, %v835
      %v837 = vand.u32 %v836, 4294901760
      %838 = vmatmul.f32.gmra.mxu0 %v837
      %v839 = vpop.f32.mrf.mxu0
      %v840 = vadd.f32 %v814, %v839
      %841 = vdwg.mxu0
      %842 = vmatpush.xpose.msra.mxu0 0.0
      %843 = vmatpush.xpose.msra.mxu0 0.0
      %844 = vmatpush.xpose.msra.mxu0 0.0
      %845 = vmatpush.xpose.msra.mxu0 0.0
      %846 = vmatpush.xpose.msra.mxu0 0.0
      %847 = vmatpush.xpose.msra.mxu0 0.0
      %848 = vmatpush.xpose.msra.mxu0 0.0
      %849 = vmatpush.xpose.msra.mxu0 0.0
      %850 = vmatpush.xpose.msra.mxu0 0.0
      %851 = vmatpush.xpose.msra.mxu0 0.0
      %852 = vmatpush.xpose.msra.mxu0 0.0
      %853 = vmatpush.xpose.msra.mxu0 0.0
      %854 = vmatpush.xpose.msra.mxu0 0.0
      %855 = vmatpush.xpose.msra.mxu0 0.0
      %856 = vmatpush.xpose.msra.mxu0 0.0
      %v857 = vand.u32 %v82, 4294901760
      %v858 = vsub.f32 %v82, %v857
      %v859 = vand.u32 %v858, 4294901760
      %v860 = vsub.f32 %v858, %v859
      %v861 = vand.u32 %v860, 4294901760
      %862 = vmatpush.xpose.msra.mxu0 %v861
      %v863 = vand.u32 %v82, 4294901760
      %864 = vmatmul.f32.gmra.mxu0 %v863
      %v865 = vpop.f32.mrf.mxu0
      %v866 = vadd.f32 %v840, %v865
      %867 = vdwg.mxu0
      %868 = vmatpush.xpose.msra.mxu0 0.0
      %869 = vmatpush.xpose.msra.mxu0 0.0
      %870 = vmatpush.xpose.msra.mxu0 0.0
      %871 = vmatpush.xpose.msra.mxu0 0.0
      %872 = vmatpush.xpose.msra.mxu0 0.0
      %873 = vmatpush.xpose.msra.mxu0 0.0
      %874 = vmatpush.xpose.msra.mxu0 0.0
      %875 = vmatpush.xpose.msra.mxu0 0.0
      %876 = vmatpush.xpose.msra.mxu0 0.0
      %877 = vmatpush.xpose.msra.mxu0 0.0
      %878 = vmatpush.xpose.msra.mxu0 0.0
      %879 = vmatpush.xpose.msra.mxu0 0.0
      %880 = vmatpush.xpose.msra.mxu0 0.0
      %881 = vmatpush.xpose.msra.mxu0 0.0
      %882 = vmatpush.xpose.msra.mxu0 0.0
      %v883 = vand.u32 %v82, 4294901760
      %v884 = vsub.f32 %v82, %v883
      %885 = vmatpush.xpose.msra.mxu0 %v884
      %v886 = vand.u32 %v82, 4294901760
      %v887 = vsub.f32 %v82, %v886
      %888 = vmatmul.f32.gmra.mxu0 %v887
      %v889 = vpop.f32.mrf.mxu0
      %v890 = vadd.f32 %v866, %v889
      %891 = vdwg.mxu0
      %892 = vmatpush.xpose.msra.mxu0 0.0
      %893 = vmatpush.xpose.msra.mxu0 0.0
      %894 = vmatpush.xpose.msra.mxu0 0.0
      %895 = vmatpush.xpose.msra.mxu0 0.0
      %896 = vmatpush.xpose.msra.mxu0 0.0
      %897 = vmatpush.xpose.msra.mxu0 0.0
      %898 = vmatpush.xpose.msra.mxu0 0.0
      %899 = vmatpush.xpose.msra.mxu0 0.0
      %900 = vmatpush.xpose.msra.mxu0 0.0
      %901 = vmatpush.xpose.msra.mxu0 0.0
      %902 = vmatpush.xpose.msra.mxu0 0.0
      %903 = vmatpush.xpose.msra.mxu0 0.0
      %904 = vmatpush.xpose.msra.mxu0 0.0
      %905 = vmatpush.xpose.msra.mxu0 0.0
      %906 = vmatpush.xpose.msra.mxu0 0.0
      %v907 = vand.u32 %v82, 4294901760
      %908 = vmatpush.xpose.msra.mxu0 %v907
      %v909 = vand.u32 %v82, 4294901760
      %v910 = vsub.f32 %v82, %v909
      %v911 = vand.u32 %v910, 4294901760
      %912 = vmatmul.f32.gmra.mxu0 %v911
      %v913 = vpop.f32.mrf.mxu0
      %v914 = vadd.f32 %v890, %v913
      %915 = vdwg.mxu0
      %916 = vmatpush.xpose.msra.mxu0 0.0
      %917 = vmatpush.xpose.msra.mxu0 0.0
      %918 = vmatpush.xpose.msra.mxu0 0.0
      %919 = vmatpush.xpose.msra.mxu0 0.0
      %920 = vmatpush.xpose.msra.mxu0 0.0
      %921 = vmatpush.xpose.msra.mxu0 0.0
      %922 = vmatpush.xpose.msra.mxu0 0.0
      %923 = vmatpush.xpose.msra.mxu0 0.0
      %924 = vmatpush.xpose.msra.mxu0 0.0
      %925 = vmatpush.xpose.msra.mxu0 0.0
      %926 = vmatpush.xpose.msra.mxu0 0.0
      %927 = vmatpush.xpose.msra.mxu0 0.0
      %928 = vmatpush.xpose.msra.mxu0 0.0
      %929 = vmatpush.xpose.msra.mxu0 0.0
      %930 = vmatpush.xpose.msra.mxu0 0.0
      %v931 = vand.u32 %v82, 4294901760
      %v932 = vsub.f32 %v82, %v931
      %v933 = vand.u32 %v932, 4294901760
      %934 = vmatpush.xpose.msra.mxu0 %v933
      %v935 = vand.u32 %v82, 4294901760
      %936 = vmatmul.f32.gmra.mxu0 %v935
      %v937 = vpop.f32.mrf.mxu0
      %v938 = vadd.f32 %v914, %v937
      %939 = vdwg.mxu0
      %940 = vmatpush.xpose.msra.mxu0 0.0
      %941 = vmatpush.xpose.msra.mxu0 0.0
      %942 = vmatpush.xpose.msra.mxu0 0.0
      %943 = vmatpush.xpose.msra.mxu0 0.0
      %944 = vmatpush.xpose.msra.mxu0 0.0
      %945 = vmatpush.xpose.msra.mxu0 0.0
      %946 = vmatpush.xpose.msra.mxu0 0.0
      %947 = vmatpush.xpose.msra.mxu0 0.0
      %948 = vmatpush.xpose.msra.mxu0 0.0
      %949 = vmatpush.xpose.msra.mxu0 0.0
      %950 = vmatpush.xpose.msra.mxu0 0.0
      %951 = vmatpush.xpose.msra.mxu0 0.0
      %952 = vmatpush.xpose.msra.mxu0 0.0
      %953 = vmatpush.xpose.msra.mxu0 0.0
      %954 = vmatpush.xpose.msra.mxu0 0.0
      %v955 = vand.u32 %v82, 4294901760
      %956 = vmatpush.xpose.msra.mxu0 %v955
      %v957 = vand.u32 %v82, 4294901760
      %958 = vmatmul.f32.gmra.mxu0 %v957
      %v959 = vpop.f32.mrf.mxu0
      %v960 = vadd.f32 %v938, %v959
      %961 = vdwg.mxu0
      %962 = vmatpush.xpose.msra.mxu0 0.0
      %963 = vmatpush.xpose.msra.mxu0 0.0
      %964 = vmatpush.xpose.msra.mxu0 0.0
      %965 = vmatpush.xpose.msra.mxu0 0.0
      %966 = vmatpush.xpose.msra.mxu0 0.0
      %967 = vmatpush.xpose.msra.mxu0 0.0
      %968 = vmatpush.xpose.msra.mxu0 0.0
      %969 = vmatpush.xpose.msra.mxu0 0.0
      %970 = vmatpush.xpose.msra.mxu0 0.0
      %971 = vmatpush.xpose.msra.mxu0 0.0
      %972 = vmatpush.xpose.msra.mxu0 0.0
      %973 = vmatpush.xpose.msra.mxu0 0.0
      %974 = vmatpush.xpose.msra.mxu0 0.0
      %975 = vmatpush.xpose.msra.mxu0 0.0
      %976 = vmatpush.xpose.msra.mxu0 0.0
      %v977 = vand.u32 %v83, 4294901760
      %978 = vmatpush.xpose.msra.mxu0 %v977
      %v979 = vand.u32 %v83, 4294901760
      %v980 = vsub.f32 %v83, %v979
      %v981 = vand.u32 %v980, 4294901760
      %v982 = vsub.f32 %v980, %v981
      %v983 = vand.u32 %v982, 4294901760
      %984 = vmatmul.f32.gmra.mxu0 %v983
      %v985 = vpop.f32.mrf.mxu0
      %v986 = vadd.f32 %v960, %v985
      %987 = vdwg.mxu0
      %988 = vmatpush.xpose.msra.mxu0 0.0
      %989 = vmatpush.xpose.msra.mxu0 0.0
      %990 = vmatpush.xpose.msra.mxu0 0.0
      %991 = vmatpush.xpose.msra.mxu0 0.0
      %992 = vmatpush.xpose.msra.mxu0 0.0
      %993 = vmatpush.xpose.msra.mxu0 0.0
      %994 = vmatpush.xpose.msra.mxu0 0.0
      %995 = vmatpush.xpose.msra.mxu0 0.0
      %996 = vmatpush.xpose.msra.mxu0 0.0
      %997 = vmatpush.xpose.msra.mxu0 0.0
      %998 = vmatpush.xpose.msra.mxu0 0.0
      %999 = vmatpush.xpose.msra.mxu0 0.0
      %1000 = vmatpush.xpose.msra.mxu0 0.0
      %1001 = vmatpush.xpose.msra.mxu0 0.0
      %1002 = vmatpush.xpose.msra.mxu0 0.0
      %v1003 = vand.u32 %v83, 4294901760
      %v1004 = vsub.f32 %v83, %v1003
      %v1005 = vand.u32 %v1004, 4294901760
      %v1006 = vsub.f32 %v1004, %v1005
      %v1007 = vand.u32 %v1006, 4294901760
      %1008 = vmatpush.xpose.msra.mxu0 %v1007
      %v1009 = vand.u32 %v83, 4294901760
      %1010 = vmatmul.f32.gmra.mxu0 %v1009
      %v1011 = vpop.f32.mrf.mxu0
      %v1012 = vadd.f32 %v986, %v1011
      %1013 = vdwg.mxu0
      %1014 = vmatpush.xpose.msra.mxu0 0.0
      %1015 = vmatpush.xpose.msra.mxu0 0.0
      %1016 = vmatpush.xpose.msra.mxu0 0.0
      %1017 = vmatpush.xpose.msra.mxu0 0.0
      %1018 = vmatpush.xpose.msra.mxu0 0.0
      %1019 = vmatpush.xpose.msra.mxu0 0.0
      %1020 = vmatpush.xpose.msra.mxu0 0.0
      %1021 = vmatpush.xpose.msra.mxu0 0.0
      %1022 = vmatpush.xpose.msra.mxu0 0.0
      %1023 = vmatpush.xpose.msra.mxu0 0.0
      %1024 = vmatpush.xpose.msra.mxu0 0.0
      %1025 = vmatpush.xpose.msra.mxu0 0.0
      %1026 = vmatpush.xpose.msra.mxu0 0.0
      %1027 = vmatpush.xpose.msra.mxu0 0.0
      %1028 = vmatpush.xpose.msra.mxu0 0.0
      %v1029 = vand.u32 %v83, 4294901760
      %v1030 = vsub.f32 %v83, %v1029
      %1031 = vmatpush.xpose.msra.mxu0 %v1030
      %v1032 = vand.u32 %v83, 4294901760
      %v1033 = vsub.f32 %v83, %v1032
      %1034 = vmatmul.f32.gmra.mxu0 %v1033
      %v1035 = vpop.f32.mrf.mxu0
      %v1036 = vadd.f32 %v1012, %v1035
      %1037 = vdwg.mxu0
      %1038 = vmatpush.xpose.msra.mxu0 0.0
      %1039 = vmatpush.xpose.msra.mxu0 0.0
      %1040 = vmatpush.xpose.msra.mxu0 0.0
      %1041 = vmatpush.xpose.msra.mxu0 0.0
      %1042 = vmatpush.xpose.msra.mxu0 0.0
      %1043 = vmatpush.xpose.msra.mxu0 0.0
      %1044 = vmatpush.xpose.msra.mxu0 0.0
      %1045 = vmatpush.xpose.msra.mxu0 0.0
      %1046 = vmatpush.xpose.msra.mxu0 0.0
      %1047 = vmatpush.xpose.msra.mxu0 0.0
      %1048 = vmatpush.xpose.msra.mxu0 0.0
      %1049 = vmatpush.xpose.msra.mxu0 0.0
      %1050 = vmatpush.xpose.msra.mxu0 0.0
      %1051 = vmatpush.xpose.msra.mxu0 0.0
      %1052 = vmatpush.xpose.msra.mxu0 0.0
      %v1053 = vand.u32 %v83, 4294901760
      %1054 = vmatpush.xpose.msra.mxu0 %v1053
      %v1055 = vand.u32 %v83, 4294901760
      %v1056 = vsub.f32 %v83, %v1055
      %v1057 = vand.u32 %v1056, 4294901760
      %1058 = vmatmul.f32.gmra.mxu0 %v1057
      %v1059 = vpop.f32.mrf.mxu0
      %v1060 = vadd.f32 %v1036, %v1059
      %1061 = vdwg.mxu0
      %1062 = vmatpush.xpose.msra.mxu0 0.0
      %1063 = vmatpush.xpose.msra.mxu0 0.0
      %1064 = vmatpush.xpose.msra.mxu0 0.0
      %1065 = vmatpush.xpose.msra.mxu0 0.0
      %1066 = vmatpush.xpose.msra.mxu0 0.0
      %1067 = vmatpush.xpose.msra.mxu0 0.0
      %1068 = vmatpush.xpose.msra.mxu0 0.0
      %1069 = vmatpush.xpose.msra.mxu0 0.0
      %1070 = vmatpush.xpose.msra.mxu0 0.0
      %1071 = vmatpush.xpose.msra.mxu0 0.0
      %1072 = vmatpush.xpose.msra.mxu0 0.0
      %1073 = vmatpush.xpose.msra.mxu0 0.0
      %1074 = vmatpush.xpose.msra.mxu0 0.0
      %1075 = vmatpush.xpose.msra.mxu0 0.0
      %1076 = vmatpush.xpose.msra.mxu0 0.0
      %v1077 = vand.u32 %v83, 4294901760
      %v1078 = vsub.f32 %v83, %v1077
      %v1079 = vand.u32 %v1078, 4294901760
      %1080 = vmatpush.xpose.msra.mxu0 %v1079
      %v1081 = vand.u32 %v83, 4294901760
      %1082 = vmatmul.f32.gmra.mxu0 %v1081
      %v1083 = vpop.f32.mrf.mxu0
      %v1084 = vadd.f32 %v1060, %v1083
      %1085 = vdwg.mxu0
      %1086 = vmatpush.xpose.msra.mxu0 0.0
      %1087 = vmatpush.xpose.msra.mxu0 0.0
      %1088 = vmatpush.xpose.msra.mxu0 0.0
      %1089 = vmatpush.xpose.msra.mxu0 0.0
      %1090 = vmatpush.xpose.msra.mxu0 0.0
      %1091 = vmatpush.xpose.msra.mxu0 0.0
      %1092 = vmatpush.xpose.msra.mxu0 0.0
      %1093 = vmatpush.xpose.msra.mxu0 0.0
      %1094 = vmatpush.xpose.msra.mxu0 0.0
      %1095 = vmatpush.xpose.msra.mxu0 0.0
      %1096 = vmatpush.xpose.msra.mxu0 0.0
      %1097 = vmatpush.xpose.msra.mxu0 0.0
      %1098 = vmatpush.xpose.msra.mxu0 0.0
      %1099 = vmatpush.xpose.msra.mxu0 0.0
      %1100 = vmatpush.xpose.msra.mxu0 0.0
      %v1101 = vand.u32 %v83, 4294901760
      %1102 = vmatpush.xpose.msra.mxu0 %v1101
      %v1103 = vand.u32 %v83, 4294901760
      %1104 = vmatmul.f32.gmra.mxu0 %v1103
      %v1105 = vpop.f32.mrf.mxu0
      %v1106 = vadd.f32 %v1084, %v1105
      %1107 = vdwg.mxu0
      %1108 = vmatpush.xpose.msra.mxu0 0.0
      %1109 = vmatpush.xpose.msra.mxu0 0.0
      %1110 = vmatpush.xpose.msra.mxu0 0.0
      %1111 = vmatpush.xpose.msra.mxu0 0.0
      %1112 = vmatpush.xpose.msra.mxu0 0.0
      %1113 = vmatpush.xpose.msra.mxu0 0.0
      %1114 = vmatpush.xpose.msra.mxu0 0.0
      %1115 = vmatpush.xpose.msra.mxu0 0.0
      %1116 = vmatpush.xpose.msra.mxu0 0.0
      %1117 = vmatpush.xpose.msra.mxu0 0.0
      %1118 = vmatpush.xpose.msra.mxu0 0.0
      %1119 = vmatpush.xpose.msra.mxu0 0.0
      %1120 = vmatpush.xpose.msra.mxu0 0.0
      %1121 = vmatpush.xpose.msra.mxu0 0.0
      %1122 = vmatpush.xpose.msra.mxu0 0.0
      %v1123 = vand.u32 %v84, 4294901760
      %1124 = vmatpush.xpose.msra.mxu0 %v1123
      %v1125 = vand.u32 %v84, 4294901760
      %v1126 = vsub.f32 %v84, %v1125
      %v1127 = vand.u32 %v1126, 4294901760
      %v1128 = vsub.f32 %v1126, %v1127
      %v1129 = vand.u32 %v1128, 4294901760
      %1130 = vmatmul.f32.gmra.mxu0 %v1129
      %v1131 = vpop.f32.mrf.mxu0
      %v1132 = vadd.f32 %v1106, %v1131
      %1133 = vdwg.mxu0
      %1134 = vmatpush.xpose.msra.mxu0 0.0
      %1135 = vmatpush.xpose.msra.mxu0 0.0
      %1136 = vmatpush.xpose.msra.mxu0 0.0
      %1137 = vmatpush.xpose.msra.mxu0 0.0
      %1138 = vmatpush.xpose.msra.mxu0 0.0
      %1139 = vmatpush.xpose.msra.mxu0 0.0
      %1140 = vmatpush.xpose.msra.mxu0 0.0
      %1141 = vmatpush.xpose.msra.mxu0 0.0
      %1142 = vmatpush.xpose.msra.mxu0 0.0
      %1143 = vmatpush.xpose.msra.mxu0 0.0
      %1144 = vmatpush.xpose.msra.mxu0 0.0
      %1145 = vmatpush.xpose.msra.mxu0 0.0
      %1146 = vmatpush.xpose.msra.mxu0 0.0
      %1147 = vmatpush.xpose.msra.mxu0 0.0
      %1148 = vmatpush.xpose.msra.mxu0 0.0
      %v1149 = vand.u32 %v84, 4294901760
      %v1150 = vsub.f32 %v84, %v1149
      %v1151 = vand.u32 %v1150, 4294901760
      %v1152 = vsub.f32 %v1150, %v1151
      %v1153 = vand.u32 %v1152, 4294901760
      %1154 = vmatpush.xpose.msra.mxu0 %v1153
      %v1155 = vand.u32 %v84, 4294901760
      %1156 = vmatmul.f32.gmra.mxu0 %v1155
      %v1157 = vpop.f32.mrf.mxu0
      %v1158 = vadd.f32 %v1132, %v1157
      %1159 = vdwg.mxu0
      %1160 = vmatpush.xpose.msra.mxu0 0.0
      %1161 = vmatpush.xpose.msra.mxu0 0.0
      %1162 = vmatpush.xpose.msra.mxu0 0.0
      %1163 = vmatpush.xpose.msra.mxu0 0.0
      %1164 = vmatpush.xpose.msra.mxu0 0.0
      %1165 = vmatpush.xpose.msra.mxu0 0.0
      %1166 = vmatpush.xpose.msra.mxu0 0.0
      %1167 = vmatpush.xpose.msra.mxu0 0.0
      %1168 = vmatpush.xpose.msra.mxu0 0.0
      %1169 = vmatpush.xpose.msra.mxu0 0.0
      %1170 = vmatpush.xpose.msra.mxu0 0.0
      %1171 = vmatpush.xpose.msra.mxu0 0.0
      %1172 = vmatpush.xpose.msra.mxu0 0.0
      %1173 = vmatpush.xpose.msra.mxu0 0.0
      %1174 = vmatpush.xpose.msra.mxu0 0.0
      %v1175 = vand.u32 %v84, 4294901760
      %v1176 = vsub.f32 %v84, %v1175
      %1177 = vmatpush.xpose.msra.mxu0 %v1176
      %v1178 = vand.u32 %v84, 4294901760
      %v1179 = vsub.f32 %v84, %v1178
      %1180 = vmatmul.f32.gmra.mxu0 %v1179
      %v1181 = vpop.f32.mrf.mxu0
      %v1182 = vadd.f32 %v1158, %v1181
      %1183 = vdwg.mxu0
      %1184 = vmatpush.xpose.msra.mxu0 0.0
      %1185 = vmatpush.xpose.msra.mxu0 0.0
      %1186 = vmatpush.xpose.msra.mxu0 0.0
      %1187 = vmatpush.xpose.msra.mxu0 0.0
      %1188 = vmatpush.xpose.msra.mxu0 0.0
      %1189 = vmatpush.xpose.msra.mxu0 0.0
      %1190 = vmatpush.xpose.msra.mxu0 0.0
      %1191 = vmatpush.xpose.msra.mxu0 0.0
      %1192 = vmatpush.xpose.msra.mxu0 0.0
      %1193 = vmatpush.xpose.msra.mxu0 0.0
      %1194 = vmatpush.xpose.msra.mxu0 0.0
      %1195 = vmatpush.xpose.msra.mxu0 0.0
      %1196 = vmatpush.xpose.msra.mxu0 0.0
      %1197 = vmatpush.xpose.msra.mxu0 0.0
      %1198 = vmatpush.xpose.msra.mxu0 0.0
      %v1199 = vand.u32 %v84, 4294901760
      %1200 = vmatpush.xpose.msra.mxu0 %v1199
      %v1201 = vand.u32 %v84, 4294901760
      %v1202 = vsub.f32 %v84, %v1201
      %v1203 = vand.u32 %v1202, 4294901760
      %1204 = vmatmul.f32.gmra.mxu0 %v1203
      %v1205 = vpop.f32.mrf.mxu0
      %v1206 = vadd.f32 %v1182, %v1205
      %1207 = vdwg.mxu0
      %1208 = vmatpush.xpose.msra.mxu0 0.0
      %1209 = vmatpush.xpose.msra.mxu0 0.0
      %1210 = vmatpush.xpose.msra.mxu0 0.0
      %1211 = vmatpush.xpose.msra.mxu0 0.0
      %1212 = vmatpush.xpose.msra.mxu0 0.0
      %1213 = vmatpush.xpose.msra.mxu0 0.0
      %1214 = vmatpush.xpose.msra.mxu0 0.0
      %1215 = vmatpush.xpose.msra.mxu0 0.0
      %1216 = vmatpush.xpose.msra.mxu0 0.0
      %1217 = vmatpush.xpose.msra.mxu0 0.0
      %1218 = vmatpush.xpose.msra.mxu0 0.0
      %1219 = vmatpush.xpose.msra.mxu0 0.0
      %1220 = vmatpush.xpose.msra.mxu0 0.0
      %1221 = vmatpush.xpose.msra.mxu0 0.0
      %1222 = vmatpush.xpose.msra.mxu0 0.0
      %v1223 = vand.u32 %v84, 4294901760
      %v1224 = vsub.f32 %v84, %v1223
      %v1225 = vand.u32 %v1224, 4294901760
      %1226 = vmatpush.xpose.msra.mxu0 %v1225
      %v1227 = vand.u32 %v84, 4294901760
      %1228 = vmatmul.f32.gmra.mxu0 %v1227
      %v1229 = vpop.f32.mrf.mxu0
      %v1230 = vadd.f32 %v1206, %v1229
      %1231 = vdwg.mxu0
      %1232 = vmatpush.xpose.msra.mxu0 0.0
      %1233 = vmatpush.xpose.msra.mxu0 0.0
      %1234 = vmatpush.xpose.msra.mxu0 0.0
      %1235 = vmatpush.xpose.msra.mxu0 0.0
      %1236 = vmatpush.xpose.msra.mxu0 0.0
      %1237 = vmatpush.xpose.msra.mxu0 0.0
      %1238 = vmatpush.xpose.msra.mxu0 0.0
      %1239 = vmatpush.xpose.msra.mxu0 0.0
      %1240 = vmatpush.xpose.msra.mxu0 0.0
      %1241 = vmatpush.xpose.msra.mxu0 0.0
      %1242 = vmatpush.xpose.msra.mxu0 0.0
      %1243 = vmatpush.xpose.msra.mxu0 0.0
      %1244 = vmatpush.xpose.msra.mxu0 0.0
      %1245 = vmatpush.xpose.msra.mxu0 0.0
      %1246 = vmatpush.xpose.msra.mxu0 0.0
      %v1247 = vand.u32 %v84, 4294901760
      %1248 = vmatpush.xpose.msra.mxu0 %v1247
      %v1249 = vand.u32 %v84, 4294901760
      %1250 = vmatmul.f32.gmra.mxu0 %v1249
      %v1251 = vpop.f32.mrf.mxu0
      %v1252 = vadd.f32 %v1230, %v1251
      %1253 = vdwg.mxu0
      %v1254 = vadd.f32 %v85, %v1252
      %vm1255 = vcmask 64512
      %1256 = vst.msk [vmem:[#allocation2] sm:$0xff] %vm1255, %v1254
      %v1257 = vld [vmem:[#allocation7] sm:$0xff]
      %v1258 = vld [vmem:[#allocation7 + $0x8] sm:$0xff]
      %v1259 = vld [vmem:[#allocation7 + $0x10] sm:$0xff]
      %v1260 = vld [vmem:[#allocation7 + $0x18] sm:$0xff]
      %v1261 = vld [vmem:[#allocation3] sm:$0xff]
      %vm1262 = vcmask 523264
      %v1264 = vsel %vm1262, %v1260, 0
      %1266 = vmatpush.xpose.msra.mxu0 0.0
      %1267 = vmatpush.xpose.msra.mxu0 0.0
      %1268 = vmatpush.xpose.msra.mxu0 0.0
      %1269 = vmatpush.xpose.msra.mxu0 0.0
      %1270 = vmatpush.xpose.msra.mxu0 0.0
      %1271 = vmatpush.xpose.msra.mxu0 0.0
      %1272 = vmatpush.xpose.msra.mxu0 0.0
      %1273 = vmatpush.xpose.msra.mxu0 0.0
      %1274 = vmatpush.xpose.msra.mxu0 0.0
      %1275 = vmatpush.xpose.msra.mxu0 0.0
      %1276 = vmatpush.xpose.msra.mxu0 0.0
      %1277 = vmatpush.xpose.msra.mxu0 0.0
      %1278 = vmatpush.xpose.msra.mxu0 0.0
      %1279 = vmatpush.xpose.msra.mxu0 0.0
      %1280 = vmatpush.xpose.msra.mxu0 0.0
      %v1281 = vand.u32 %v1257, 4294901760
      %1282 = vmatpush.xpose.msra.mxu0 %v1281
      %v1283 = vand.u32 %v1257, 4294901760
      %v1284 = vsub.f32 %v1257, %v1283
      %v1285 = vand.u32 %v1284, 4294901760
      %v1286 = vsub.f32 %v1284, %v1285
      %v1287 = vand.u32 %v1286, 4294901760
      %1288 = vmatmul.f32.gmra.mxu0 %v1287
      %v1289 = vpop.f32.mrf.mxu0
      %v1290 = vadd.f32 0.0, %v1289
      %1291 = vdwg.mxu0
      %1292 = vmatpush.xpose.msra.mxu0 0.0
      %1293 = vmatpush.xpose.msra.mxu0 0.0
      %1294 = vmatpush.xpose.msra.mxu0 0.0
      %1295 = vmatpush.xpose.msra.mxu0 0.0
      %1296 = vmatpush.xpose.msra.mxu0 0.0
      %1297 = vmatpush.xpose.msra.mxu0 0.0
      %1298 = vmatpush.xpose.msra.mxu0 0.0
      %1299 = vmatpush.xpose.msra.mxu0 0.0
      %1300 = vmatpush.xpose.msra.mxu0 0.0
      %1301 = vmatpush.xpose.msra.mxu0 0.0
      %1302 = vmatpush.xpose.msra.mxu0 0.0
      %1303 = vmatpush.xpose.msra.mxu0 0.0
      %1304 = vmatpush.xpose.msra.mxu0 0.0
      %1305 = vmatpush.xpose.msra.mxu0 0.0
      %1306 = vmatpush.xpose.msra.mxu0 0.0
      %v1307 = vand.u32 %v1257, 4294901760
      %v1308 = vsub.f32 %v1257, %v1307
      %v1309 = vand.u32 %v1308, 4294901760
      %v1310 = vsub.f32 %v1308, %v1309
      %v1311 = vand.u32 %v1310, 4294901760
      %1312 = vmatpush.xpose.msra.mxu0 %v1311
      %v1313 = vand.u32 %v1257, 4294901760
      %1314 = vmatmul.f32.gmra.mxu0 %v1313
      %v1315 = vpop.f32.mrf.mxu0
      %v1316 = vadd.f32 %v1290, %v1315
      %1317 = vdwg.mxu0
      %1318 = vmatpush.xpose.msra.mxu0 0.0
      %1319 = vmatpush.xpose.msra.mxu0 0.0
      %1320 = vmatpush.xpose.msra.mxu0 0.0
      %1321 = vmatpush.xpose.msra.mxu0 0.0
      %1322 = vmatpush.xpose.msra.mxu0 0.0
      %1323 = vmatpush.xpose.msra.mxu0 0.0
      %1324 = vmatpush.xpose.msra.mxu0 0.0
      %1325 = vmatpush.xpose.msra.mxu0 0.0
      %1326 = vmatpush.xpose.msra.mxu0 0.0
      %1327 = vmatpush.xpose.msra.mxu0 0.0
      %1328 = vmatpush.xpose.msra.mxu0 0.0
      %1329 = vmatpush.xpose.msra.mxu0 0.0
      %1330 = vmatpush.xpose.msra.mxu0 0.0
      %1331 = vmatpush.xpose.msra.mxu0 0.0
      %1332 = vmatpush.xpose.msra.mxu0 0.0
      %v1333 = vand.u32 %v1257, 4294901760
      %v1334 = vsub.f32 %v1257, %v1333
      %1335 = vmatpush.xpose.msra.mxu0 %v1334
      %v1336 = vand.u32 %v1257, 4294901760
      %v1337 = vsub.f32 %v1257, %v1336
      %1338 = vmatmul.f32.gmra.mxu0 %v1337
      %v1339 = vpop.f32.mrf.mxu0
      %v1340 = vadd.f32 %v1316, %v1339
      %1341 = vdwg.mxu0
      %1342 = vmatpush.xpose.msra.mxu0 0.0
      %1343 = vmatpush.xpose.msra.mxu0 0.0
      %1344 = vmatpush.xpose.msra.mxu0 0.0
      %1345 = vmatpush.xpose.msra.mxu0 0.0
      %1346 = vmatpush.xpose.msra.mxu0 0.0
      %1347 = vmatpush.xpose.msra.mxu0 0.0
      %1348 = vmatpush.xpose.msra.mxu0 0.0
      %1349 = vmatpush.xpose.msra.mxu0 0.0
      %1350 = vmatpush.xpose.msra.mxu0 0.0
      %1351 = vmatpush.xpose.msra.mxu0 0.0
      %1352 = vmatpush.xpose.msra.mxu0 0.0
      %1353 = vmatpush.xpose.msra.mxu0 0.0
      %1354 = vmatpush.xpose.msra.mxu0 0.0
      %1355 = vmatpush.xpose.msra.mxu0 0.0
      %1356 = vmatpush.xpose.msra.mxu0 0.0
      %v1357 = vand.u32 %v1257, 4294901760
      %1358 = vmatpush.xpose.msra.mxu0 %v1357
      %v1359 = vand.u32 %v1257, 4294901760
      %v1360 = vsub.f32 %v1257, %v1359
      %v1361 = vand.u32 %v1360, 4294901760
      %1362 = vmatmul.f32.gmra.mxu0 %v1361
      %v1363 = vpop.f32.mrf.mxu0
      %v1364 = vadd.f32 %v1340, %v1363
      %1365 = vdwg.mxu0
      %1366 = vmatpush.xpose.msra.mxu0 0.0
      %1367 = vmatpush.xpose.msra.mxu0 0.0
      %1368 = vmatpush.xpose.msra.mxu0 0.0
      %1369 = vmatpush.xpose.msra.mxu0 0.0
      %1370 = vmatpush.xpose.msra.mxu0 0.0
      %1371 = vmatpush.xpose.msra.mxu0 0.0
      %1372 = vmatpush.xpose.msra.mxu0 0.0
      %1373 = vmatpush.xpose.msra.mxu0 0.0
      %1374 = vmatpush.xpose.msra.mxu0 0.0
      %1375 = vmatpush.xpose.msra.mxu0 0.0
      %1376 = vmatpush.xpose.msra.mxu0 0.0
      %1377 = vmatpush.xpose.msra.mxu0 0.0
      %1378 = vmatpush.xpose.msra.mxu0 0.0
      %1379 = vmatpush.xpose.msra.mxu0 0.0
      %1380 = vmatpush.xpose.msra.mxu0 0.0
      %v1381 = vand.u32 %v1257, 4294901760
      %v1382 = vsub.f32 %v1257, %v1381
      %v1383 = vand.u32 %v1382, 4294901760
      %1384 = vmatpush.xpose.msra.mxu0 %v1383
      %v1385 = vand.u32 %v1257, 4294901760
      %1386 = vmatmul.f32.gmra.mxu0 %v1385
      %v1387 = vpop.f32.mrf.mxu0
      %v1388 = vadd.f32 %v1364, %v1387
      %1389 = vdwg.mxu0
      %1390 = vmatpush.xpose.msra.mxu0 0.0
      %1391 = vmatpush.xpose.msra.mxu0 0.0
      %1392 = vmatpush.xpose.msra.mxu0 0.0
      %1393 = vmatpush.xpose.msra.mxu0 0.0
      %1394 = vmatpush.xpose.msra.mxu0 0.0
      %1395 = vmatpush.xpose.msra.mxu0 0.0
      %1396 = vmatpush.xpose.msra.mxu0 0.0
      %1397 = vmatpush.xpose.msra.mxu0 0.0
      %1398 = vmatpush.xpose.msra.mxu0 0.0
      %1399 = vmatpush.xpose.msra.mxu0 0.0
      %1400 = vmatpush.xpose.msra.mxu0 0.0
      %1401 = vmatpush.xpose.msra.mxu0 0.0
      %1402 = vmatpush.xpose.msra.mxu0 0.0
      %1403 = vmatpush.xpose.msra.mxu0 0.0
      %1404 = vmatpush.xpose.msra.mxu0 0.0
      %v1405 = vand.u32 %v1257, 4294901760
      %1406 = vmatpush.xpose.msra.mxu0 %v1405
      %v1407 = vand.u32 %v1257, 4294901760
      %1408 = vmatmul.f32.gmra.mxu0 %v1407
      %v1409 = vpop.f32.mrf.mxu0
      %v1410 = vadd.f32 %v1388, %v1409
      %1411 = vdwg.mxu0
      %1412 = vmatpush.xpose.msra.mxu0 0.0
      %1413 = vmatpush.xpose.msra.mxu0 0.0
      %1414 = vmatpush.xpose.msra.mxu0 0.0
      %1415 = vmatpush.xpose.msra.mxu0 0.0
      %1416 = vmatpush.xpose.msra.mxu0 0.0
      %1417 = vmatpush.xpose.msra.mxu0 0.0
      %1418 = vmatpush.xpose.msra.mxu0 0.0
      %1419 = vmatpush.xpose.msra.mxu0 0.0
      %1420 = vmatpush.xpose.msra.mxu0 0.0
      %1421 = vmatpush.xpose.msra.mxu0 0.0
      %1422 = vmatpush.xpose.msra.mxu0 0.0
      %1423 = vmatpush.xpose.msra.mxu0 0.0
      %1424 = vmatpush.xpose.msra.mxu0 0.0
      %1425 = vmatpush.xpose.msra.mxu0 0.0
      %1426 = vmatpush.xpose.msra.mxu0 0.0
      %v1427 = vand.u32 %v1258, 4294901760
      %1428 = vmatpush.xpose.msra.mxu0 %v1427
      %v1429 = vand.u32 %v1258, 4294901760
      %v1430 = vsub.f32 %v1258, %v1429
      %v1431 = vand.u32 %v1430, 4294901760
      %v1432 = vsub.f32 %v1430, %v1431
      %v1433 = vand.u32 %v1432, 4294901760
      %1434 = vmatmul.f32.gmra.mxu0 %v1433
      %v1435 = vpop.f32.mrf.mxu0
      %v1436 = vadd.f32 %v1410, %v1435
      %1437 = vdwg.mxu0
      %1438 = vmatpush.xpose.msra.mxu0 0.0
      %1439 = vmatpush.xpose.msra.mxu0 0.0
      %1440 = vmatpush.xpose.msra.mxu0 0.0
      %1441 = vmatpush.xpose.msra.mxu0 0.0
      %1442 = vmatpush.xpose.msra.mxu0 0.0
      %1443 = vmatpush.xpose.msra.mxu0 0.0
      %1444 = vmatpush.xpose.msra.mxu0 0.0
      %1445 = vmatpush.xpose.msra.mxu0 0.0
      %1446 = vmatpush.xpose.msra.mxu0 0.0
      %1447 = vmatpush.xpose.msra.mxu0 0.0
      %1448 = vmatpush.xpose.msra.mxu0 0.0
      %1449 = vmatpush.xpose.msra.mxu0 0.0
      %1450 = vmatpush.xpose.msra.mxu0 0.0
      %1451 = vmatpush.xpose.msra.mxu0 0.0
      %1452 = vmatpush.xpose.msra.mxu0 0.0
      %v1453 = vand.u32 %v1258, 4294901760
      %v1454 = vsub.f32 %v1258, %v1453
      %v1455 = vand.u32 %v1454, 4294901760
      %v1456 = vsub.f32 %v1454, %v1455
      %v1457 = vand.u32 %v1456, 4294901760
      %1458 = vmatpush.xpose.msra.mxu0 %v1457
      %v1459 = vand.u32 %v1258, 4294901760
      %1460 = vmatmul.f32.gmra.mxu0 %v1459
      %v1461 = vpop.f32.mrf.mxu0
      %v1462 = vadd.f32 %v1436, %v1461
      %1463 = vdwg.mxu0
      %1464 = vmatpush.xpose.msra.mxu0 0.0
      %1465 = vmatpush.xpose.msra.mxu0 0.0
      %1466 = vmatpush.xpose.msra.mxu0 0.0
      %1467 = vmatpush.xpose.msra.mxu0 0.0
      %1468 = vmatpush.xpose.msra.mxu0 0.0
      %1469 = vmatpush.xpose.msra.mxu0 0.0
      %1470 = vmatpush.xpose.msra.mxu0 0.0
      %1471 = vmatpush.xpose.msra.mxu0 0.0
      %1472 = vmatpush.xpose.msra.mxu0 0.0
      %1473 = vmatpush.xpose.msra.mxu0 0.0
      %1474 = vmatpush.xpose.msra.mxu0 0.0
      %1475 = vmatpush.xpose.msra.mxu0 0.0
      %1476 = vmatpush.xpose.msra.mxu0 0.0
      %1477 = vmatpush.xpose.msra.mxu0 0.0
      %1478 = vmatpush.xpose.msra.mxu0 0.0
      %v1479 = vand.u32 %v1258, 4294901760
      %v1480 = vsub.f32 %v1258, %v1479
      %1481 = vmatpush.xpose.msra.mxu0 %v1480
      %v1482 = vand.u32 %v1258, 4294901760
      %v1483 = vsub.f32 %v1258, %v1482
      %1484 = vmatmul.f32.gmra.mxu0 %v1483
      %v1485 = vpop.f32.mrf.mxu0
      %v1486 = vadd.f32 %v1462, %v1485
      %1487 = vdwg.mxu0
      %1488 = vmatpush.xpose.msra.mxu0 0.0
      %1489 = vmatpush.xpose.msra.mxu0 0.0
      %1490 = vmatpush.xpose.msra.mxu0 0.0
      %1491 = vmatpush.xpose.msra.mxu0 0.0
      %1492 = vmatpush.xpose.msra.mxu0 0.0
      %1493 = vmatpush.xpose.msra.mxu0 0.0
      %1494 = vmatpush.xpose.msra.mxu0 0.0
      %1495 = vmatpush.xpose.msra.mxu0 0.0
      %1496 = vmatpush.xpose.msra.mxu0 0.0
      %1497 = vmatpush.xpose.msra.mxu0 0.0
      %1498 = vmatpush.xpose.msra.mxu0 0.0
      %1499 = vmatpush.xpose.msra.mxu0 0.0
      %1500 = vmatpush.xpose.msra.mxu0 0.0
      %1501 = vmatpush.xpose.msra.mxu0 0.0
      %1502 = vmatpush.xpose.msra.mxu0 0.0
      %v1503 = vand.u32 %v1258, 4294901760
      %1504 = vmatpush.xpose.msra.mxu0 %v1503
      %v1505 = vand.u32 %v1258, 4294901760
      %v1506 = vsub.f32 %v1258, %v1505
      %v1507 = vand.u32 %v1506, 4294901760
      %1508 = vmatmul.f32.gmra.mxu0 %v1507
      %v1509 = vpop.f32.mrf.mxu0
      %v1510 = vadd.f32 %v1486, %v1509
      %1511 = vdwg.mxu0
      %1512 = vmatpush.xpose.msra.mxu0 0.0
      %1513 = vmatpush.xpose.msra.mxu0 0.0
      %1514 = vmatpush.xpose.msra.mxu0 0.0
      %1515 = vmatpush.xpose.msra.mxu0 0.0
      %1516 = vmatpush.xpose.msra.mxu0 0.0
      %1517 = vmatpush.xpose.msra.mxu0 0.0
      %1518 = vmatpush.xpose.msra.mxu0 0.0
      %1519 = vmatpush.xpose.msra.mxu0 0.0
      %1520 = vmatpush.xpose.msra.mxu0 0.0
      %1521 = vmatpush.xpose.msra.mxu0 0.0
      %1522 = vmatpush.xpose.msra.mxu0 0.0
      %1523 = vmatpush.xpose.msra.mxu0 0.0
      %1524 = vmatpush.xpose.msra.mxu0 0.0
      %1525 = vmatpush.xpose.msra.mxu0 0.0
      %1526 = vmatpush.xpose.msra.mxu0 0.0
      %v1527 = vand.u32 %v1258, 4294901760
      %v1528 = vsub.f32 %v1258, %v1527
      %v1529 = vand.u32 %v1528, 4294901760
      %1530 = vmatpush.xpose.msra.mxu0 %v1529
      %v1531 = vand.u32 %v1258, 4294901760
      %1532 = vmatmul.f32.gmra.mxu0 %v1531
      %v1533 = vpop.f32.mrf.mxu0
      %v1534 = vadd.f32 %v1510, %v1533
      %1535 = vdwg.mxu0
      %1536 = vmatpush.xpose.msra.mxu0 0.0
      %1537 = vmatpush.xpose.msra.mxu0 0.0
      %1538 = vmatpush.xpose.msra.mxu0 0.0
      %1539 = vmatpush.xpose.msra.mxu0 0.0
      %1540 = vmatpush.xpose.msra.mxu0 0.0
      %1541 = vmatpush.xpose.msra.mxu0 0.0
      %1542 = vmatpush.xpose.msra.mxu0 0.0
      %1543 = vmatpush.xpose.msra.mxu0 0.0
      %1544 = vmatpush.xpose.msra.mxu0 0.0
      %1545 = vmatpush.xpose.msra.mxu0 0.0
      %1546 = vmatpush.xpose.msra.mxu0 0.0
      %1547 = vmatpush.xpose.msra.mxu0 0.0
      %1548 = vmatpush.xpose.msra.mxu0 0.0
      %1549 = vmatpush.xpose.msra.mxu0 0.0
      %1550 = vmatpush.xpose.msra.mxu0 0.0
      %v1551 = vand.u32 %v1258, 4294901760
      %1552 = vmatpush.xpose.msra.mxu0 %v1551
      %v1553 = vand.u32 %v1258, 4294901760
      %1554 = vmatmul.f32.gmra.mxu0 %v1553
      %v1555 = vpop.f32.mrf.mxu0
      %v1556 = vadd.f32 %v1534, %v1555
      %1557 = vdwg.mxu0
      %1558 = vmatpush.xpose.msra.mxu0 0.0
      %1559 = vmatpush.xpose.msra.mxu0 0.0
      %1560 = vmatpush.xpose.msra.mxu0 0.0
      %1561 = vmatpush.xpose.msra.mxu0 0.0
      %1562 = vmatpush.xpose.msra.mxu0 0.0
      %1563 = vmatpush.xpose.msra.mxu0 0.0
      %1564 = vmatpush.xpose.msra.mxu0 0.0
      %1565 = vmatpush.xpose.msra.mxu0 0.0
      %1566 = vmatpush.xpose.msra.mxu0 0.0
      %1567 = vmatpush.xpose.msra.mxu0 0.0
      %1568 = vmatpush.xpose.msra.mxu0 0.0
      %1569 = vmatpush.xpose.msra.mxu0 0.0
      %1570 = vmatpush.xpose.msra.mxu0 0.0
      %1571 = vmatpush.xpose.msra.mxu0 0.0
      %1572 = vmatpush.xpose.msra.mxu0 0.0
      %v1573 = vand.u32 %v1259, 4294901760
      %1574 = vmatpush.xpose.msra.mxu0 %v1573
      %v1575 = vand.u32 %v1259, 4294901760
      %v1576 = vsub.f32 %v1259, %v1575
      %v1577 = vand.u32 %v1576, 4294901760
      %v1578 = vsub.f32 %v1576, %v1577
      %v1579 = vand.u32 %v1578, 4294901760
      %1580 = vmatmul.f32.gmra.mxu0 %v1579
      %v1581 = vpop.f32.mrf.mxu0
      %v1582 = vadd.f32 %v1556, %v1581
      %1583 = vdwg.mxu0
      %1584 = vmatpush.xpose.msra.mxu0 0.0
      %1585 = vmatpush.xpose.msra.mxu0 0.0
      %1586 = vmatpush.xpose.msra.mxu0 0.0
      %1587 = vmatpush.xpose.msra.mxu0 0.0
      %1588 = vmatpush.xpose.msra.mxu0 0.0
      %1589 = vmatpush.xpose.msra.mxu0 0.0
      %1590 = vmatpush.xpose.msra.mxu0 0.0
      %1591 = vmatpush.xpose.msra.mxu0 0.0
      %1592 = vmatpush.xpose.msra.mxu0 0.0
      %1593 = vmatpush.xpose.msra.mxu0 0.0
      %1594 = vmatpush.xpose.msra.mxu0 0.0
      %1595 = vmatpush.xpose.msra.mxu0 0.0
      %1596 = vmatpush.xpose.msra.mxu0 0.0
      %1597 = vmatpush.xpose.msra.mxu0 0.0
      %1598 = vmatpush.xpose.msra.mxu0 0.0
      %v1599 = vand.u32 %v1259, 4294901760
      %v1600 = vsub.f32 %v1259, %v1599
      %v1601 = vand.u32 %v1600, 4294901760
      %v1602 = vsub.f32 %v1600, %v1601
      %v1603 = vand.u32 %v1602, 4294901760
      %1604 = vmatpush.xpose.msra.mxu0 %v1603
      %v1605 = vand.u32 %v1259, 4294901760
      %1606 = vmatmul.f32.gmra.mxu0 %v1605
      %v1607 = vpop.f32.mrf.mxu0
      %v1608 = vadd.f32 %v1582, %v1607
      %1609 = vdwg.mxu0
      %1610 = vmatpush.xpose.msra.mxu0 0.0
      %1611 = vmatpush.xpose.msra.mxu0 0.0
      %1612 = vmatpush.xpose.msra.mxu0 0.0
      %1613 = vmatpush.xpose.msra.mxu0 0.0
      %1614 = vmatpush.xpose.msra.mxu0 0.0
      %1615 = vmatpush.xpose.msra.mxu0 0.0
      %1616 = vmatpush.xpose.msra.mxu0 0.0
      %1617 = vmatpush.xpose.msra.mxu0 0.0
      %1618 = vmatpush.xpose.msra.mxu0 0.0
      %1619 = vmatpush.xpose.msra.mxu0 0.0
      %1620 = vmatpush.xpose.msra.mxu0 0.0
      %1621 = vmatpush.xpose.msra.mxu0 0.0
      %1622 = vmatpush.xpose.msra.mxu0 0.0
      %1623 = vmatpush.xpose.msra.mxu0 0.0
      %1624 = vmatpush.xpose.msra.mxu0 0.0
      %v1625 = vand.u32 %v1259, 4294901760
      %v1626 = vsub.f32 %v1259, %v1625
      %1627 = vmatpush.xpose.msra.mxu0 %v1626
      %v1628 = vand.u32 %v1259, 4294901760
      %v1629 = vsub.f32 %v1259, %v1628
      %1630 = vmatmul.f32.gmra.mxu0 %v1629
      %v1631 = vpop.f32.mrf.mxu0
      %v1632 = vadd.f32 %v1608, %v1631
      %1633 = vdwg.mxu0
      %1634 = vmatpush.xpose.msra.mxu0 0.0
      %1635 = vmatpush.xpose.msra.mxu0 0.0
      %1636 = vmatpush.xpose.msra.mxu0 0.0
      %1637 = vmatpush.xpose.msra.mxu0 0.0
      %1638 = vmatpush.xpose.msra.mxu0 0.0
      %1639 = vmatpush.xpose.msra.mxu0 0.0
      %1640 = vmatpush.xpose.msra.mxu0 0.0
      %1641 = vmatpush.xpose.msra.mxu0 0.0
      %1642 = vmatpush.xpose.msra.mxu0 0.0
      %1643 = vmatpush.xpose.msra.mxu0 0.0
      %1644 = vmatpush.xpose.msra.mxu0 0.0
      %1645 = vmatpush.xpose.msra.mxu0 0.0
      %1646 = vmatpush.xpose.msra.mxu0 0.0
      %1647 = vmatpush.xpose.msra.mxu0 0.0
      %1648 = vmatpush.xpose.msra.mxu0 0.0
      %v1649 = vand.u32 %v1259, 4294901760
      %1650 = vmatpush.xpose.msra.mxu0 %v1649
      %v1651 = vand.u32 %v1259, 4294901760
      %v1652 = vsub.f32 %v1259, %v1651
      %v1653 = vand.u32 %v1652, 4294901760
      %1654 = vmatmul.f32.gmra.mxu0 %v1653
      %v1655 = vpop.f32.mrf.mxu0
      %v1656 = vadd.f32 %v1632, %v1655
      %1657 = vdwg.mxu0
      %1658 = vmatpush.xpose.msra.mxu0 0.0
      %1659 = vmatpush.xpose.msra.mxu0 0.0
      %1660 = vmatpush.xpose.msra.mxu0 0.0
      %1661 = vmatpush.xpose.msra.mxu0 0.0
      %1662 = vmatpush.xpose.msra.mxu0 0.0
      %1663 = vmatpush.xpose.msra.mxu0 0.0
      %1664 = vmatpush.xpose.msra.mxu0 0.0
      %1665 = vmatpush.xpose.msra.mxu0 0.0
      %1666 = vmatpush.xpose.msra.mxu0 0.0
      %1667 = vmatpush.xpose.msra.mxu0 0.0
      %1668 = vmatpush.xpose.msra.mxu0 0.0
      %1669 = vmatpush.xpose.msra.mxu0 0.0
      %1670 = vmatpush.xpose.msra.mxu0 0.0
      %1671 = vmatpush.xpose.msra.mxu0 0.0
      %1672 = vmatpush.xpose.msra.mxu0 0.0
      %v1673 = vand.u32 %v1259, 4294901760
      %v1674 = vsub.f32 %v1259, %v1673
      %v1675 = vand.u32 %v1674, 4294901760
      %1676 = vmatpush.xpose.msra.mxu0 %v1675
      %v1677 = vand.u32 %v1259, 4294901760
      %1678 = vmatmul.f32.gmra.mxu0 %v1677
      %v1679 = vpop.f32.mrf.mxu0
      %v1680 = vadd.f32 %v1656, %v1679
      %1681 = vdwg.mxu0
      %1682 = vmatpush.xpose.msra.mxu0 0.0
      %1683 = vmatpush.xpose.msra.mxu0 0.0
      %1684 = vmatpush.xpose.msra.mxu0 0.0
      %1685 = vmatpush.xpose.msra.mxu0 0.0
      %1686 = vmatpush.xpose.msra.mxu0 0.0
      %1687 = vmatpush.xpose.msra.mxu0 0.0
      %1688 = vmatpush.xpose.msra.mxu0 0.0
      %1689 = vmatpush.xpose.msra.mxu0 0.0
      %1690 = vmatpush.xpose.msra.mxu0 0.0
      %1691 = vmatpush.xpose.msra.mxu0 0.0
      %1692 = vmatpush.xpose.msra.mxu0 0.0
      %1693 = vmatpush.xpose.msra.mxu0 0.0
      %1694 = vmatpush.xpose.msra.mxu0 0.0
      %1695 = vmatpush.xpose.msra.mxu0 0.0
      %1696 = vmatpush.xpose.msra.mxu0 0.0
      %v1697 = vand.u32 %v1259, 4294901760
      %1698 = vmatpush.xpose.msra.mxu0 %v1697
      %v1699 = vand.u32 %v1259, 4294901760
      %1700 = vmatmul.f32.gmra.mxu0 %v1699
      %v1701 = vpop.f32.mrf.mxu0
      %v1702 = vadd.f32 %v1680, %v1701
      %1703 = vdwg.mxu0
      %1704 = vmatpush.xpose.msra.mxu0 0.0
      %1705 = vmatpush.xpose.msra.mxu0 0.0
      %1706 = vmatpush.xpose.msra.mxu0 0.0
      %1707 = vmatpush.xpose.msra.mxu0 0.0
      %1708 = vmatpush.xpose.msra.mxu0 0.0
      %1709 = vmatpush.xpose.msra.mxu0 0.0
      %1710 = vmatpush.xpose.msra.mxu0 0.0
      %1711 = vmatpush.xpose.msra.mxu0 0.0
      %1712 = vmatpush.xpose.msra.mxu0 0.0
      %1713 = vmatpush.xpose.msra.mxu0 0.0
      %1714 = vmatpush.xpose.msra.mxu0 0.0
      %1715 = vmatpush.xpose.msra.mxu0 0.0
      %1716 = vmatpush.xpose.msra.mxu0 0.0
      %1717 = vmatpush.xpose.msra.mxu0 0.0
      %1718 = vmatpush.xpose.msra.mxu0 0.0
      %v1719 = vand.u32 %v1264, 4294901760
      %1720 = vmatpush.xpose.msra.mxu0 %v1719
      %v1721 = vand.u32 %v1264, 4294901760
      %v1722 = vsub.f32 %v1264, %v1721
      %v1723 = vand.u32 %v1722, 4294901760
      %v1724 = vsub.f32 %v1722, %v1723
      %v1725 = vand.u32 %v1724, 4294901760
      %1726 = vmatmul.f32.gmra.mxu0 %v1725
      %v1727 = vpop.f32.mrf.mxu0
      %v1728 = vadd.f32 %v1702, %v1727
      %1729 = vdwg.mxu0
      %1730 = vmatpush.xpose.msra.mxu0 0.0
      %1731 = vmatpush.xpose.msra.mxu0 0.0
      %1732 = vmatpush.xpose.msra.mxu0 0.0
      %1733 = vmatpush.xpose.msra.mxu0 0.0
      %1734 = vmatpush.xpose.msra.mxu0 0.0
      %1735 = vmatpush.xpose.msra.mxu0 0.0
      %1736 = vmatpush.xpose.msra.mxu0 0.0
      %1737 = vmatpush.xpose.msra.mxu0 0.0
      %1738 = vmatpush.xpose.msra.mxu0 0.0
      %1739 = vmatpush.xpose.msra.mxu0 0.0
      %1740 = vmatpush.xpose.msra.mxu0 0.0
      %1741 = vmatpush.xpose.msra.mxu0 0.0
      %1742 = vmatpush.xpose.msra.mxu0 0.0
      %1743 = vmatpush.xpose.msra.mxu0 0.0
      %1744 = vmatpush.xpose.msra.mxu0 0.0
      %v1745 = vand.u32 %v1264, 4294901760
      %v1746 = vsub.f32 %v1264, %v1745
      %v1747 = vand.u32 %v1746, 4294901760
      %v1748 = vsub.f32 %v1746, %v1747
      %v1749 = vand.u32 %v1748, 4294901760
      %1750 = vmatpush.xpose.msra.mxu0 %v1749
      %v1751 = vand.u32 %v1264, 4294901760
      %1752 = vmatmul.f32.gmra.mxu0 %v1751
      %v1753 = vpop.f32.mrf.mxu0
      %v1754 = vadd.f32 %v1728, %v1753
      %1755 = vdwg.mxu0
      %1756 = vmatpush.xpose.msra.mxu0 0.0
      %1757 = vmatpush.xpose.msra.mxu0 0.0
      %1758 = vmatpush.xpose.msra.mxu0 0.0
      %1759 = vmatpush.xpose.msra.mxu0 0.0
      %1760 = vmatpush.xpose.msra.mxu0 0.0
      %1761 = vmatpush.xpose.msra.mxu0 0.0
      %1762 = vmatpush.xpose.msra.mxu0 0.0
      %1763 = vmatpush.xpose.msra.mxu0 0.0
      %1764 = vmatpush.xpose.msra.mxu0 0.0
      %1765 = vmatpush.xpose.msra.mxu0 0.0
      %1766 = vmatpush.xpose.msra.mxu0 0.0
      %1767 = vmatpush.xpose.msra.mxu0 0.0
      %1768 = vmatpush.xpose.msra.mxu0 0.0
      %1769 = vmatpush.xpose.msra.mxu0 0.0
      %1770 = vmatpush.xpose.msra.mxu0 0.0
      %v1771 = vand.u32 %v1264, 4294901760
      %v1772 = vsub.f32 %v1264, %v1771
      %1773 = vmatpush.xpose.msra.mxu0 %v1772
      %v1774 = vand.u32 %v1264, 4294901760
      %v1775 = vsub.f32 %v1264, %v1774
      %1776 = vmatmul.f32.gmra.mxu0 %v1775
      %v1777 = vpop.f32.mrf.mxu0
      %v1778 = vadd.f32 %v1754, %v1777
      %1779 = vdwg.mxu0
      %1780 = vmatpush.xpose.msra.mxu0 0.0
      %1781 = vmatpush.xpose.msra.mxu0 0.0
      %1782 = vmatpush.xpose.msra.mxu0 0.0
      %1783 = vmatpush.xpose.msra.mxu0 0.0
      %1784 = vmatpush.xpose.msra.mxu0 0.0
      %1785 = vmatpush.xpose.msra.mxu0 0.0
      %1786 = vmatpush.xpose.msra.mxu0 0.0
      %1787 = vmatpush.xpose.msra.mxu0 0.0
      %1788 = vmatpush.xpose.msra.mxu0 0.0
      %1789 = vmatpush.xpose.msra.mxu0 0.0
      %1790 = vmatpush.xpose.msra.mxu0 0.0
      %1791 = vmatpush.xpose.msra.mxu0 0.0
      %1792 = vmatpush.xpose.msra.mxu0 0.0
      %1793 = vmatpush.xpose.msra.mxu0 0.0
      %1794 = vmatpush.xpose.msra.mxu0 0.0
      %v1795 = vand.u32 %v1264, 4294901760
      %1796 = vmatpush.xpose.msra.mxu0 %v1795
      %v1797 = vand.u32 %v1264, 4294901760
      %v1798 = vsub.f32 %v1264, %v1797
      %v1799 = vand.u32 %v1798, 4294901760
      %1800 = vmatmul.f32.gmra.mxu0 %v1799
      %v1801 = vpop.f32.mrf.mxu0
      %v1802 = vadd.f32 %v1778, %v1801
      %1803 = vdwg.mxu0
      %1804 = vmatpush.xpose.msra.mxu0 0.0
      %1805 = vmatpush.xpose.msra.mxu0 0.0
      %1806 = vmatpush.xpose.msra.mxu0 0.0
      %1807 = vmatpush.xpose.msra.mxu0 0.0
      %1808 = vmatpush.xpose.msra.mxu0 0.0
      %1809 = vmatpush.xpose.msra.mxu0 0.0
      %1810 = vmatpush.xpose.msra.mxu0 0.0
      %1811 = vmatpush.xpose.msra.mxu0 0.0
      %1812 = vmatpush.xpose.msra.mxu0 0.0
      %1813 = vmatpush.xpose.msra.mxu0 0.0
      %1814 = vmatpush.xpose.msra.mxu0 0.0
      %1815 = vmatpush.xpose.msra.mxu0 0.0
      %1816 = vmatpush.xpose.msra.mxu0 0.0
      %1817 = vmatpush.xpose.msra.mxu0 0.0
      %1818 = vmatpush.xpose.msra.mxu0 0.0
      %v1819 = vand.u32 %v1264, 4294901760
      %v1820 = vsub.f32 %v1264, %v1819
      %v1821 = vand.u32 %v1820, 4294901760
      %1822 = vmatpush.xpose.msra.mxu0 %v1821
      %v1823 = vand.u32 %v1264, 4294901760
      %1824 = vmatmul.f32.gmra.mxu0 %v1823
      %v1825 = vpop.f32.mrf.mxu0
      %v1826 = vadd.f32 %v1802, %v1825
      %1827 = vdwg.mxu0
      %1828 = vmatpush.xpose.msra.mxu0 0.0
      %1829 = vmatpush.xpose.msra.mxu0 0.0
      %1830 = vmatpush.xpose.msra.mxu0 0.0
      %1831 = vmatpush.xpose.msra.mxu0 0.0
      %1832 = vmatpush.xpose.msra.mxu0 0.0
      %1833 = vmatpush.xpose.msra.mxu0 0.0
      %1834 = vmatpush.xpose.msra.mxu0 0.0
      %1835 = vmatpush.xpose.msra.mxu0 0.0
      %1836 = vmatpush.xpose.msra.mxu0 0.0
      %1837 = vmatpush.xpose.msra.mxu0 0.0
      %1838 = vmatpush.xpose.msra.mxu0 0.0
      %1839 = vmatpush.xpose.msra.mxu0 0.0
      %1840 = vmatpush.xpose.msra.mxu0 0.0
      %1841 = vmatpush.xpose.msra.mxu0 0.0
      %1842 = vmatpush.xpose.msra.mxu0 0.0
      %v1843 = vand.u32 %v1264, 4294901760
      %1844 = vmatpush.xpose.msra.mxu0 %v1843
      %v1845 = vand.u32 %v1264, 4294901760
      %1846 = vmatmul.f32.gmra.mxu0 %v1845
      %v1847 = vpop.f32.mrf.mxu0
      %v1848 = vadd.f32 %v1826, %v1847
      %1849 = vdwg.mxu0
      %v1850 = vadd.f32 %v1261, %v1848
      %1851 = vst.msk [vmem:[#allocation3] sm:$0xff] %vm1255, %v1850
    $region25: #{tpu_custom_call.1} parent=1 // pred_fallthru
      _
    // Predicated region
    $region26: #{tpu_custom_call.1} parent=1 // pred_check
      %p1852 = pneg %p63
    $region27: #{tpu_custom_call.1} parent=1 // pred_check_branch
      %1854 = sbr.rel (%p1852) target = $region29
    $region28: #{tpu_custom_call.1} parent=1 // pred_region
      %v1855 = vld [vmem:[#allocation2] sm:$0xff]
      %vm1856 = vcmask 64512
      %1857 = vst.msk [vmem:[#allocation9] sm:$0xff] %vm1856, %v1855
      %v1858 = vld [vmem:[#allocation3] sm:$0xff]
      %1859 = vst.msk [vmem:[#allocation10] sm:$0xff] %vm1856, %v1858
    $region29: #{tpu_custom_call.1} parent=1 // pred_fallthru
      _
    // Predicated region
    $region30: #{tpu_custom_call.1} parent=1 // pred_check
      _
    $region31: #{tpu_custom_call.1} parent=1 // pred_check_branch
      %1861 = sbr.rel (0) target = $region33
    $region32: #{tpu_custom_call.1} parent=1 // pred_region
      %1863 = vsyncadd [#allocation6], 0
      %s1865 = sshll.u32 [#allocation9], 4
      %s1866 = int_to_ptr.vmem [resolvable:$true] %s1865
      %s1867 = sshll.u32 %s2, 4
      %s1868 = int_to_ptr.hbm [resolvable:$true] %s1867
      %1870 = dma.vmem_to_hbm [thread:$0]  %s1866, 128, %s1868, [#allocation6]
    $region33: #{tpu_custom_call.1} parent=1 // pred_fallthru
      _
    // Predicated region
    $region34: #{tpu_custom_call.1} parent=1 // pred_check
      _
    $region35: #{tpu_custom_call.1} parent=1 // pred_check_branch
      %1872 = sbr.rel (0) target = $region37
    $region36: #{tpu_custom_call.1} parent=1 // pred_region
      %1874 = vsyncadd [#allocation11], 0
      %s1876 = sshll.u32 [#allocation10], 4
      %s1877 = int_to_ptr.vmem [resolvable:$true] %s1876
      %s1878 = sshll.u32 %s3, 4
      %s1879 = int_to_ptr.hbm [resolvable:$true] %s1878
      %1881 = dma.vmem_to_hbm [thread:$0]  %s1877, 128, %s1879, [#allocation11]
    $region37: #{tpu_custom_call.1} parent=1 // pred_fallthru
      _
    // Predicated region
    $region38: #{tpu_custom_call.1} parent=1 // pred_check
      _
    $region39: #{tpu_custom_call.1} parent=1 // pred_check_branch
      %1883 = sbr.rel (0) target = $region41
    $region40: #{tpu_custom_call.1} parent=1 // pred_region
      %1885 = dma.done [#allocation6], 128
    $region41: #{tpu_custom_call.1} parent=1 // pred_fallthru
      _
    // Predicated region
    $region42: #{tpu_custom_call.1} parent=1 // pred_check
      _
    $region43: #{tpu_custom_call.1} parent=1 // pred_check_branch
      %1887 = sbr.rel (0) target = $region45
    $region44: #{tpu_custom_call.1} parent=1 // pred_region
      %1889 = dma.done [#allocation11], 128
    $region45: #{tpu_custom_call.1} parent=1 // pred_fallthru
      _
    %1890 = vsyncpa [#allocation5], 1
    %1891 = vsyncpa [#allocation8], 1
    %1892 = vsyncpa [#allocation6], 1
    %1893 = vsyncpa [#allocation11], 1

</llo_original>
